<compile_context>
chip_gen: v5e
topology: v5e:2x2
jax: 0.10.0
libtpu: 0.0.40
codegen_flags: <defaults>
</compile_context>

<pallas_src>
import jax
import jax.numpy as jnp
from jax.experimental import pallas as pl
from jax.experimental.pallas import tpu as pltpu

VISUAL_DIM = 1080   # hard-coded in the PyTorch module
FUSED_DIM = 1024
LN_EPS = 1e-5       # torch.nn.LayerNorm default
LANE = 128


def _round_up(x, m):
    return (x + m - 1) // m * m


def fusion_kernel(text_ref, b1_ref, w1t_ref, w2_ref, b2_ref, out_ref):
    """One sequence tile: text @ W1t + b1_eff -> ReLU -> LayerNorm -> @ W2' + b2'."""
    # Fusion Linear(H+1080 -> 1024). The visual half of the concat-matmul is already
    # folded into b1_eff (= visual @ W1[H:] + b1), broadcast over sequence rows.
    # bf16 x bf16 -> f32 accumulation on the MXU (native fast path).
    pre = jnp.dot(text_ref[...], w1t_ref[...],
                  preferred_element_type=jnp.float32) + b1_ref[...]

    # ReLU (f32 VPU)
    h = jnp.maximum(pre, 0.0)

    # LayerNorm(1024) — single fused pass: sum and sum-of-squares together, then
    # var = E[h^2] - mean^2. Affine (gamma, beta) folded into W2'/b2' offline.
    inv_n = 1.0 / FUSED_DIM
    s1 = jnp.sum(h, axis=-1, keepdims=True)
    s2 = jnp.sum(h * h, axis=-1, keepdims=True)
    mean = s1 * inv_n
    var = jnp.maximum(s2 * inv_n - mean * mean, 0.0)
    hn = (h - mean) * jax.lax.rsqrt(var + LN_EPS)

    # Dropout(0.3) / Dropout(0.5): identity in eval mode.

    # Output Linear(1024 -> num_labels), lane-padded; bf16 x bf16 -> f32 on the MXU.
    out = jnp.dot(hn.astype(w2_ref.dtype), w2_ref[...],
                  preferred_element_type=jnp.float32) + b2_ref[...]
    out_ref[...] = out.astype(out_ref.dtype)


def prepare_params(torch_params, num_labels):
    """torch_params holds torch-layout tensors (nn.Linear weight is (out, in)).

    Produces kernel-layout parameters: explicit transpose to (in, out), W1 split into
    text/visual halves, text hidden dim zero-padded to a 128 multiple, LN affine folded
    into the output projection, bf16 weight storage, output dim padded to 128 lanes.
    """
    w1 = torch_params["fusion_w"].T.astype(jnp.float32)    # (H+1080, 1024)
    b1 = torch_params["fusion_b"].astype(jnp.float32)      # (1024,)
    gamma = torch_params["ln_gamma"].astype(jnp.float32)   # (1024,)
    beta = torch_params["ln_beta"].astype(jnp.float32)     # (1024,)
    w2 = torch_params["out_w"].T.astype(jnp.float32)       # (1024, num_labels)
    b2 = torch_params["out_b"].astype(jnp.float32)         # (num_labels,)

    H = w1.shape[0] - VISUAL_DIM
    Hp = _round_up(H, LANE)                                 # MXU-friendly K dim

    # Fold LayerNorm affine into the output projection:
    #   (hn * gamma + beta) @ W2 + b2 == hn @ (gamma[:, None] * W2) + (beta @ W2 + b2)
    w2_fold = gamma[:, None] * w2
    b2_fold = beta @ w2 + b2

    # Pad output feature dim to a lane-dense multiple of 128 (unmasked stores).
    P = _round_up(num_labels, LANE)
    w2_pad = jnp.zeros((FUSED_DIM, P), jnp.float32).at[:, :num_labels].set(w2_fold)
    b2_pad = jnp.zeros((1, P), jnp.float32).at[:, :num_labels].set(b2_fold)

    # Zero-pad the text half of W1 along the hidden dim (padded text rows are zero too).
    w1_text = jnp.zeros((Hp, FUSED_DIM), jnp.float32).at[:H].set(w1[:H])

    return {
        "w1_text": w1_text.astype(jnp.bfloat16),            # (Hp, 1024)    bf16 storage
        "w1_vis": w1[H:].astype(jnp.bfloat16),               # (1080, 1024)  bf16 storage
        "b1": b1.reshape(1, FUSED_DIM),                       # f32
        "w2": w2_pad.astype(jnp.bfloat16),                    # (1024, P)     bf16 storage
        "b2": b2_pad,                                          # (1, P)        f32
        "hidden": H,
        "hidden_pad": Hp,
        "num_labels": num_labels,
    }


def combined_forward(text_out, visual_out, p, *, seq_tile=256, out_dtype=jnp.bfloat16):
    """text_out: (1, S, H) last_hidden_state; visual_out: (VISUAL_DIM,)."""
    assert text_out.shape[0] == 1, "CombinedModel broadcasts visual over a batch-1 text output"
    S, H = text_out.shape[1], text_out.shape[2]
    assert H == p["hidden"]
    Hp = p["hidden_pad"]
    P = p["w2"].shape[1]
    num_labels = p["num_labels"]

    # The visual GEMV is sequence-independent -> compute it once and fold it into an
    # effective bias; W1[H:] never enters the kernel and is never recomputed per tile.
    b1_eff = jnp.dot(visual_out.reshape(1, VISUAL_DIM),
                     p["w1_vis"].astype(jnp.float32),
                     preferred_element_type=jnp.float32) + p["b1"]      # (1, 1024) f32

    # bf16 streamed text; pad S to a tile multiple and H to the padded hidden dim.
    TS = max(16, min(_round_up(seq_tile, 16), _round_up(S, 16)))        # 16-row bf16 packing
    S_pad = _round_up(S, TS)
    text2d = text_out[0].astype(jnp.bfloat16)                            # (S, H)
    if S_pad != S or Hp != H:
        text2d = jnp.pad(text2d, ((0, S_pad - S), (0, Hp - H)))          # zeros are harmless

    grid = (S_pad // TS,)
    out_itemsize = jnp.dtype(out_dtype).itemsize

    # VMEM budget: double-buffered streamed blocks + (up to double-buffered) weights.
    vmem_need = (2 * TS * Hp * 2                    # text tiles (bf16)
                 + 2 * TS * P * out_itemsize        # output tiles
                 + 2 * Hp * FUSED_DIM * 2           # W1_text (bf16)
                 + 2 * FUSED_DIM * P * 2            # W2' (bf16)
                 + 2 * (FUSED_DIM + P) * 4)         # biases (f32)
    vmem_limit = min(max(int(1.25 * vmem_need) + (2 << 20), 16 << 20), 96 << 20)

    cost = pl.CostEstimate(
        flops=2 * S_pad * Hp * FUSED_DIM + 2 * S_pad * FUSED_DIM * P + 6 * S_pad * FUSED_DIM,
        transcendentals=S_pad,
        bytes_accessed=(S_pad * Hp * 2 + Hp * FUSED_DIM * 2 + FUSED_DIM * P * 2
                        + (FUSED_DIM + P) * 4 + S_pad * P * out_itemsize),
    )

    def build(single_buffer_weights):
        if single_buffer_weights:
            # Constant-index parameter blocks: single buffer (they never change).
            def const_spec(shape):
                return pl.BlockSpec(shape, lambda i: (0, 0), pipeline_mode=pl.Buffered(1))
        else:
            def const_spec(shape):
                return pl.BlockSpec(shape, lambda i: (0, 0))
        return pl.pallas_call(
            fusion_kernel,
            out_shape=jax.ShapeDtypeStruct((S_pad, P), out_dtype),
            grid=grid,
            in_specs=[
                pl.BlockSpec((TS, Hp), lambda i: (i, 0)),       # text rows (tiled, bf16)
                const_spec((1, FUSED_DIM)),                     # b1_eff (f32)
                const_spec((Hp, FUSED_DIM)),                    # W1[:H] (bf16)
                const_spec((FUSED_DIM, P)),                     # W2'    (bf16, padded)
                const_spec((1, P)),                             # b2'    (f32, padded)
            ],
            out_specs=pl.BlockSpec((TS, P), lambda i: (i, 0)),
            compiler_params=pltpu.CompilerParams(
                dimension_semantics=("parallel",),              # independent seq tiles
                vmem_limit_bytes=vmem_limit),
            cost_estimate=cost,
        )

    args = (text2d, b1_eff, p["w1_text"], p["w2"], p["b2"])
    try:
        out = build(True)(*args)
    except Exception:
        # This jax version rejects pipeline_mode single-buffering; fall back to default.
        out = build(False)(*args)

    return out[None, :S, :num_labels]                            # (1, S, num_labels) bf16


def reference_forward(text_out, visual_out, torch_params):
    """Pure-JAX mirror of CombinedModel.forward (eval mode) on the submodule outputs.

    Uses the same bf16-rounded text / W1 / W2 the kernel consumes (math in f32), so the
    comparison isolates the structural transforms (split matmul, LN fold, lane padding).
    """
    S = text_out.shape[1]
    rt = lambda x: x.astype(jnp.bfloat16).astype(jnp.float32)
    w1 = rt(torch_params["fusion_w"]).T
    w2 = rt(torch_params["out_w"]).T
    text = rt(text_out)
    vis = jnp.broadcast_to(visual_out[None, None, :], (1, S, VISUAL_DIM))
    combined = jnp.concatenate([text, vis], axis=-1)
    pre = combined @ w1 + torch_params["fusion_b"]
    h = jnp.maximum(pre, 0.0)
    mean = jnp.mean(h, axis=-1, keepdims=True)
    var = jnp.mean((h - mean) ** 2, axis=-1, keepdims=True)
    hn = (h - mean) * jax.lax.rsqrt(var + LN_EPS)
    hn = hn * torch_params["ln_gamma"] + torch_params["ln_beta"]
    return hn @ w2 + torch_params["out_b"]


if __name__ == "__main__":
    S = 8            # sequence length
    H = 32           # text_model.config.hidden_size (small test value)
    NUM_LABELS = 8

    key = jax.random.PRNGKey(0)
    ks = jax.random.split(key, 8)

    # Torch-layout parameters: nn.Linear weight is (out_features, in_features).
    torch_params = {
        "fusion_w": jax.random.normal(ks[0], (FUSED_DIM, H + VISUAL_DIM), jnp.float32) * 0.02,
        "fusion_b": jax.random.normal(ks[1], (FUSED_DIM,), jnp.float32) * 0.02,
        "ln_gamma": 1.0 + 0.1 * jax.random.normal(ks[2], (FUSED_DIM,), jnp.float32),
        "ln_beta": 0.1 * jax.random.normal(ks[3], (FUSED_DIM,), jnp.float32),
        "out_w": jax.random.normal(ks[4], (NUM_LABELS, FUSED_DIM), jnp.float32) * 0.02,
        "out_b": jax.random.normal(ks[5], (NUM_LABELS,), jnp.float32) * 0.02,
    }
    params = prepare_params(torch_params, NUM_LABELS)

    # Outputs of the (external, opaque) submodules, used as kernel inputs.
    text_out = jax.random.normal(ks[6], (1, S, H), jnp.float32)          # last_hidden_state
    visual_out = jax.random.normal(ks[7], (VISUAL_DIM,), jnp.float32)    # visual_model output

    y = combined_forward(text_out, visual_out, params)
    y = jax.block_until_ready(y)
    assert y.shape == (1, S, NUM_LABELS)

    y_ref = reference_forward(text_out, visual_out, torch_params)
    err = float(jnp.max(jnp.abs(y.astype(jnp.float32) - y_ref)))
    assert err < 2e-2, f"max abs err {err}"
    print("KERNEL_OK")
</pallas_src>

<mosaic_0001>
module attributes {stable_mosaic.version = 11 : i64} {
  func.func @fusion_kernel(%arg0: i32, %arg1: memref<16x128xbf16, #tpu.memory_space<vmem>>, %arg2: memref<1x1024xf32, #tpu.memory_space<vmem>>, %arg3: memref<128x1024xbf16, #tpu.memory_space<vmem>>, %arg4: memref<1024x128xbf16, #tpu.memory_space<vmem>>, %arg5: memref<1x128xf32, #tpu.memory_space<vmem>>, %arg6: memref<16x128xbf16, #tpu.memory_space<vmem>>) attributes {dimension_semantics = [#tpu.dimension_semantics<parallel>], iteration_bounds = array<i64: 1>, scalar_prefetch = 0 : i64, scratch_operands = 0 : i64, tpu.core_type = #tpu.core_type<tc>, window_params = [{transform_indices = @transform_0, window_bounds = array<i64: 16, 128>}, {pipeline_mode = #tpu.pipeline_mode<synchronous>, transform_indices = @transform_1, window_bounds = array<i64: 1, 1024>}, {pipeline_mode = #tpu.pipeline_mode<synchronous>, transform_indices = @transform_2, window_bounds = array<i64: 128, 1024>}, {pipeline_mode = #tpu.pipeline_mode<synchronous>, transform_indices = @transform_3, window_bounds = array<i64: 1024, 128>}, {pipeline_mode = #tpu.pipeline_mode<synchronous>, transform_indices = @transform_4, window_bounds = array<i64: 1, 128>}, {transform_indices = @transform_5, window_bounds = array<i64: 16, 128>}]} {
    %c0 = arith.constant 0 : index
    %c0_0 = arith.constant 0 : index
    %0 = vector.load %arg1[%c0, %c0_0] : memref<16x128xbf16, #tpu.memory_space<vmem>>, vector<16x128xbf16>
    %c0_1 = arith.constant 0 : index
    %c0_2 = arith.constant 0 : index
    %1 = vector.load %arg3[%c0_1, %c0_2] : memref<128x1024xbf16, #tpu.memory_space<vmem>>, vector<128x1024xbf16>
    %cst = arith.constant dense<0.000000e+00> : vector<16x1024xf32>
    %2 = tpu.matmul %0, %1, %cst {dimension_numbers = #tpu.dot_dimension_numbers<[1], [0], [0], [1], [0, 0, 1, 1], [], []>} : vector<16x128xbf16>, vector<128x1024xbf16>, vector<16x1024xf32> -> vector<16x1024xf32>
    %c0_3 = arith.constant 0 : index
    %c0_4 = arith.constant 0 : index
    %3 = vector.load %arg2[%c0_3, %c0_4] : memref<1x1024xf32, #tpu.memory_space<vmem>>, vector<1x1024xf32>
    %4 = vector.broadcast %3 : vector<1x1024xf32> to vector<16x1024xf32>
    %5 = arith.addf %2, %4 : vector<16x1024xf32>
    %cst_5 = arith.constant 0.000000e+00 : f32
    %6 = vector.broadcast %cst_5 : f32 to vector<16x1024xf32>
    %7 = arith.maximumf %5, %6 : vector<16x1024xf32>
    %cst_6 = arith.constant dense<0.000000e+00> : vector<16xf32>
    %8 = vector.multi_reduction <add>, %7, %cst_6 [1] : vector<16x1024xf32> to vector<16xf32>
    %9 = vector.shape_cast %8 : vector<16xf32> to vector<16x1xf32>
    %10 = arith.mulf %7, %7 : vector<16x1024xf32>
    %cst_7 = arith.constant dense<0.000000e+00> : vector<16xf32>
    %11 = vector.multi_reduction <add>, %10, %cst_7 [1] : vector<16x1024xf32> to vector<16xf32>
    %12 = vector.shape_cast %11 : vector<16xf32> to vector<16x1xf32>
    %cst_8 = arith.constant 9.765625E-4 : f32
    %13 = vector.broadcast %cst_8 : f32 to vector<16x1xf32>
    %14 = arith.mulf %9, %13 : vector<16x1xf32>
    %cst_9 = arith.constant 9.765625E-4 : f32
    %15 = vector.broadcast %cst_9 : f32 to vector<16x1xf32>
    %16 = arith.mulf %12, %15 : vector<16x1xf32>
    %17 = arith.mulf %14, %14 : vector<16x1xf32>
    %18 = arith.subf %16, %17 : vector<16x1xf32>
    %cst_10 = arith.constant 0.000000e+00 : f32
    %19 = vector.broadcast %cst_10 : f32 to vector<16x1xf32>
    %20 = arith.maximumf %18, %19 : vector<16x1xf32>
    %21 = vector.broadcast %14 : vector<16x1xf32> to vector<16x1024xf32>
    %22 = arith.subf %7, %21 : vector<16x1024xf32>
    %cst_11 = arith.constant 9.99999974E-6 : f32
    %23 = vector.broadcast %cst_11 : f32 to vector<16x1xf32>
    %24 = arith.addf %20, %23 : vector<16x1xf32>
    %25 = math.rsqrt %24 : vector<16x1xf32>
    %26 = vector.broadcast %25 : vector<16x1xf32> to vector<16x1024xf32>
    %27 = arith.mulf %22, %26 : vector<16x1024xf32>
    %28 = arith.truncf %27 : vector<16x1024xf32> to vector<16x1024xbf16>
    %c0_12 = arith.constant 0 : index
    %c0_13 = arith.constant 0 : index
    %29 = vector.load %arg4[%c0_12, %c0_13] : memref<1024x128xbf16, #tpu.memory_space<vmem>>, vector<1024x128xbf16>
    %cst_14 = arith.constant dense<0.000000e+00> : vector<16x128xf32>
    %30 = tpu.matmul %28, %29, %cst_14 {dimension_numbers = #tpu.dot_dimension_numbers<[1], [0], [0], [1], [0, 0, 1, 1], [], []>} : vector<16x1024xbf16>, vector<1024x128xbf16>, vector<16x128xf32> -> vector<16x128xf32>
    %c0_15 = arith.constant 0 : index
    %c0_16 = arith.constant 0 : index
    %31 = vector.load %arg5[%c0_15, %c0_16] : memref<1x128xf32, #tpu.memory_space<vmem>>, vector<1x128xf32>
    %32 = vector.broadcast %31 : vector<1x128xf32> to vector<16x128xf32>
    %33 = arith.addf %30, %32 : vector<16x128xf32>
    %34 = arith.truncf %33 : vector<16x128xf32> to vector<16x128xbf16>
    %c0_17 = arith.constant 0 : index
    %c0_18 = arith.constant 0 : index
    %35 = vector.load %arg6[%c0_17, %c0_18] : memref<16x128xbf16, #tpu.memory_space<vmem>>, vector<16x128xbf16>
    tpu.vector_store %arg6[%c0_17, %c0_18], %34 {strides = array<i32>} : memref<16x128xbf16, #tpu.memory_space<vmem>>, vector<16x128xbf16>,
    return
  }
  func.func @transform_0(%arg0: i32) -> (i32, i32) {
    %c0_i32 = arith.constant 0 : i32
    %c0_i32_0 = arith.constant 0 : i32
    return %arg0, %c0_i32 : i32, i32
  }
  func.func @transform_1(%arg0: i32) -> (i32, i32) {
    %c0_i32 = arith.constant 0 : i32
    %c0_i32_0 = arith.constant 0 : i32
    %c0_i32_1 = arith.constant 0 : i32
    return %c0_i32, %c0_i32_0 : i32, i32
  }
  func.func @transform_2(%arg0: i32) -> (i32, i32) {
    %c0_i32 = arith.constant 0 : i32
    %c0_i32_0 = arith.constant 0 : i32
    %c0_i32_1 = arith.constant 0 : i32
    return %c0_i32, %c0_i32_0 : i32, i32
  }
  func.func @transform_3(%arg0: i32) -> (i32, i32) {
    %c0_i32 = arith.constant 0 : i32
    %c0_i32_0 = arith.constant 0 : i32
    %c0_i32_1 = arith.constant 0 : i32
    return %c0_i32, %c0_i32_0 : i32, i32
  }
  func.func @transform_4(%arg0: i32) -> (i32, i32) {
    %c0_i32 = arith.constant 0 : i32
    %c0_i32_0 = arith.constant 0 : i32
    %c0_i32_1 = arith.constant 0 : i32
    return %c0_i32, %c0_i32_0 : i32, i32
  }
  func.func @transform_5(%arg0: i32) -> (i32, i32) {
    %c0_i32 = arith.constant 0 : i32
    %c0_i32_0 = arith.constant 0 : i32
    return %arg0, %c0_i32 : i32, i32
  }
}

module attributes {stable_mosaic.version = 11 : i64} {
  func.func @fusion_kernel(%arg0: i32, %arg1: memref<16x128xbf16, #tpu.memory_space<vmem>>, %arg2: memref<1x1024xf32, #tpu.memory_space<vmem>>, %arg3: memref<128x1024xbf16, #tpu.memory_space<vmem>>, %arg4: memref<1024x128xbf16, #tpu.memory_space<vmem>>, %arg5: memref<1x128xf32, #tpu.memory_space<vmem>>, %arg6: memref<16x128xbf16, #tpu.memory_space<vmem>>) attributes {dimension_semantics = [#tpu.dimension_semantics<parallel>], iteration_bounds = array<i64: 1>, scalar_prefetch = 0 : i64, scratch_operands = 0 : i64, tpu.core_type = #tpu.core_type<tc>, window_params = [{transform_indices = @transform_0, window_bounds = array<i64: 16, 128>}, {pipeline_mode = #tpu.pipeline_mode<synchronous>, transform_indices = @transform_1, window_bounds = array<i64: 1, 1024>}, {pipeline_mode = #tpu.pipeline_mode<synchronous>, transform_indices = @transform_2, window_bounds = array<i64: 128, 1024>}, {pipeline_mode = #tpu.pipeline_mode<synchronous>, transform_indices = @transform_3, window_bounds = array<i64: 1024, 128>}, {pipeline_mode = #tpu.pipeline_mode<synchronous>, transform_indices = @transform_4, window_bounds = array<i64: 1, 128>}, {transform_indices = @transform_5, window_bounds = array<i64: 16, 128>}]} {
    %c0 = arith.constant 0 : index
    %c0_0 = arith.constant 0 : index
    %0 = vector.load %arg1[%c0, %c0_0] : memref<16x128xbf16, #tpu.memory_space<vmem>>, vector<16x128xbf16>
    %c0_1 = arith.constant 0 : index
    %c0_2 = arith.constant 0 : index
    %1 = vector.load %arg3[%c0_1, %c0_2] : memref<128x1024xbf16, #tpu.memory_space<vmem>>, vector<128x1024xbf16>
    %cst = arith.constant dense<0.000000e+00> : vector<16x1024xf32>
    %2 = tpu.matmul %0, %1, %cst {dimension_numbers = #tpu.dot_dimension_numbers<[1], [0], [0], [1], [0, 0, 1, 1], [], []>} : vector<16x128xbf16>, vector<128x1024xbf16>, vector<16x1024xf32> -> vector<16x1024xf32>
    %c0_3 = arith.constant 0 : index
    %c0_4 = arith.constant 0 : index
    %3 = vector.load %arg2[%c0_3, %c0_4] : memref<1x1024xf32, #tpu.memory_space<vmem>>, vector<1x1024xf32>
    %4 = vector.broadcast %3 : vector<1x1024xf32> to vector<16x1024xf32>
    %5 = arith.addf %2, %4 : vector<16x1024xf32>
    %cst_5 = arith.constant 0.000000e+00 : f32
    %6 = vector.broadcast %cst_5 : f32 to vector<16x1024xf32>
    %7 = arith.maximumf %5, %6 : vector<16x1024xf32>
    %cst_6 = arith.constant dense<0.000000e+00> : vector<16xf32>
    %8 = vector.multi_reduction <add>, %7, %cst_6 [1] : vector<16x1024xf32> to vector<16xf32>
    %9 = vector.shape_cast %8 : vector<16xf32> to vector<16x1xf32>
    %10 = arith.mulf %7, %7 : vector<16x1024xf32>
    %cst_7 = arith.constant dense<0.000000e+00> : vector<16xf32>
    %11 = vector.multi_reduction <add>, %10, %cst_7 [1] : vector<16x1024xf32> to vector<16xf32>
    %12 = vector.shape_cast %11 : vector<16xf32> to vector<16x1xf32>
    %cst_8 = arith.constant 9.765625E-4 : f32
    %13 = vector.broadcast %cst_8 : f32 to vector<16x1xf32>
    %14 = arith.mulf %9, %13 : vector<16x1xf32>
    %cst_9 = arith.constant 9.765625E-4 : f32
    %15 = vector.broadcast %cst_9 : f32 to vector<16x1xf32>
    %16 = arith.mulf %12, %15 : vector<16x1xf32>
    %17 = arith.mulf %14, %14 : vector<16x1xf32>
    %18 = arith.subf %16, %17 : vector<16x1xf32>
    %cst_10 = arith.constant 0.000000e+00 : f32
    %19 = vector.broadcast %cst_10 : f32 to vector<16x1xf32>
    %20 = arith.maximumf %18, %19 : vector<16x1xf32>
    %21 = vector.broadcast %14 : vector<16x1xf32> to vector<16x1024xf32>
    %22 = arith.subf %7, %21 : vector<16x1024xf32>
    %cst_11 = arith.constant 9.99999974E-6 : f32
    %23 = vector.broadcast %cst_11 : f32 to vector<16x1xf32>
    %24 = arith.addf %20, %23 : vector<16x1xf32>
    %25 = math.rsqrt %24 : vector<16x1xf32>
    %26 = vector.broadcast %25 : vector<16x1xf32> to vector<16x1024xf32>
    %27 = arith.mulf %22, %26 : vector<16x1024xf32>
    %28 = arith.truncf %27 : vector<16x1024xf32> to vector<16x1024xbf16>
    %c0_12 = arith.constant 0 : index
    %c0_13 = arith.constant 0 : index
    %29 = vector.load %arg4[%c0_12, %c0_13] : memref<1024x128xbf16, #tpu.memory_space<vmem>>, vector<1024x128xbf16>
    %cst_14 = arith.constant dense<0.000000e+00> : vector<16x128xf32>
    %30 = tpu.matmul %28, %29, %cst_14 {dimension_numbers = #tpu.dot_dimension_numbers<[1], [0], [0], [1], [0, 0, 1, 1], [], []>} : vector<16x1024xbf16>, vector<1024x128xbf16>, vector<16x128xf32> -> vector<16x128xf32>
    %c0_15 = arith.constant 0 : index
    %c0_16 = arith.constant 0 : index
    %31 = vector.load %arg5[%c0_15, %c0_16] : memref<1x128xf32, #tpu.memory_space<vmem>>, vector<1x128xf32>
    %32 = vector.broadcast %31 : vector<1x128xf32> to vector<16x128xf32>
    %33 = arith.addf %30, %32 : vector<16x128xf32>
    %34 = arith.truncf %33 : vector<16x128xf32> to vector<16x128xbf16>
    %c0_17 = arith.constant 0 : index
    %c0_18 = arith.constant 0 : index
    %35 = vector.load %arg6[%c0_17, %c0_18] : memref<16x128xbf16, #tpu.memory_space<vmem>>, vector<16x128xbf16>
    tpu.vector_store %arg6[%c0_17, %c0_18], %34 {strides = array<i32>} : memref<16x128xbf16, #tpu.memory_space<vmem>>, vector<16x128xbf16>,
    return
  }
  func.func @transform_0(%arg0: i32) -> (i32, i32) {
    %c0_i32 = arith.constant 0 : i32
    %c0_i32_0 = arith.constant 0 : i32
    return %arg0, %c0_i32 : i32, i32
  }
  func.func @transform_1(%arg0: i32) -> (i32, i32) {
    %c0_i32 = arith.constant 0 : i32
    %c0_i32_0 = arith.constant 0 : i32
    %c0_i32_1 = arith.constant 0 : i32
    return %c0_i32, %c0_i32_0 : i32, i32
  }
  func.func @transform_2(%arg0: i32) -> (i32, i32) {
    %c0_i32 = arith.constant 0 : i32
    %c0_i32_0 = arith.constant 0 : i32
    %c0_i32_1 = arith.constant 0 : i32
    return %c0_i32, %c0_i32_0 : i32, i32
  }
  func.func @transform_3(%arg0: i32) -> (i32, i32) {
    %c0_i32 = arith.constant 0 : i32
    %c0_i32_0 = arith.constant 0 : i32
    %c0_i32_1 = arith.constant 0 : i32
    return %c0_i32, %c0_i32_0 : i32, i32
  }
  func.func @transform_4(%arg0: i32) -> (i32, i32) {
    %c0_i32 = arith.constant 0 : i32
    %c0_i32_0 = arith.constant 0 : i32
    %c0_i32_1 = arith.constant 0 : i32
    return %c0_i32, %c0_i32_0 : i32, i32
  }
  func.func @transform_5(%arg0: i32) -> (i32, i32) {
    %c0_i32 = arith.constant 0 : i32
    %c0_i32_0 = arith.constant 0 : i32
    return %arg0, %c0_i32 : i32, i32
  }
}

</mosaic_0001>

<llo_original>
// kernel: tpu_custom_call.1
$region0: #{tpu_custom_call.1}
  #allocation0 [shape = 'u32[]', space=smem, size = 0x4, offset = 0x4, fixed_abs, tag = 'smem constant byte address 0x4 - core index']
  #allocation1 [shape = 'u32[72,128]{1,0:T(1,128)}', space=vmem, size = 0x9000, scoped, tag = 'internal scratch']
  %s0 = inlined_call_operand.hbm [shape: bf16[16,128], index: 0, kind: input, shape index: {}]
  %s1 = inlined_call_operand.hbm [shape: f32[1,1024], index: 1, kind: input, shape index: {}]
  %s2 = inlined_call_operand.hbm [shape: bf16[128,1024], index: 2, kind: input, shape index: {}]
  %s3 = inlined_call_operand.hbm [shape: bf16[1024,128], index: 3, kind: input, shape index: {}]
  %s4 = inlined_call_operand.vmem [shape: f32[1,128], index: 4, kind: input, shape index: {}]
  %s5 = inlined_call_operand.hbm [shape: bf16[16,128], index: 5, kind: output, shape index: {}]
  %s6 = sld [smem:[#allocation0]]
  $region46: #{tpu_custom_call.1} parent=0
    _
  %s8 = ssub.s32 1, %s6
  %s9 = scalar_select 0, %s8, %s6
  $region1: #{tpu_custom_call.1} parent=0
    #allocation2 [shape = 'u8[4096]{0}', space=vmem, size = 0x1000, scoped, tag = 'input window, operand 0, single buffered']
    #allocation3 [shape = 's32[1]{0}', space=sflag, size = 0x4, scoped, tag = 'scoped memory for tpu_custom_call.1']
    #allocation4 [shape = 's32[1]{0}', space=sflag, size = 0x4, scoped, tag = 'scoped memory for tpu_custom_call.1']
    #allocation5 [shape = 'u8[4096]{0}', space=vmem, size = 0x1000, scoped, tag = 'input window, operand 1, single buffered']
    #allocation6 [shape = 's32[1]{0}', space=sflag, size = 0x4, scoped, tag = 'scoped memory for tpu_custom_call.1']
    #allocation7 [shape = 'u8[262144]{0}', space=vmem, size = 0x40000, scoped, tag = 'input window, operand 2, single buffered']
    #allocation8 [shape = 'u8[262144]{0}', space=vmem, size = 0x40000, scoped, tag = 'input window, operand 3, single buffered']
    #allocation9 [shape = 's32[1]{0}', space=sflag, size = 0x4, scoped, tag = 'scoped memory for tpu_custom_call.1']
    #allocation10 [shape = 'u8[4096]{0}', space=vmem, size = 0x1000, scoped, tag = 'output window, operand 0, single buffered']
    %10 = vsyncpa [#allocation3], 0
    %11 = vsyncpa [#allocation6], 0
    %12 = vsyncpa [#allocation9], 0
    %13 = vsyncpa [#allocation4], 0
    // Predicated region
    $region2: #{tpu_custom_call.1} parent=1 // pred_check
      _
    $region3: #{tpu_custom_call.1} parent=1 // pred_check_branch
      %15 = sbr.rel (0) target = $region5
    $region4: #{tpu_custom_call.1} parent=1 // pred_region
      %17 = vsyncadd [#allocation3], 0
      %s18 = sshll.u32 %s0, 4
      %s19 = int_to_ptr.hbm [resolvable:$true] %s18
      %s20 = sshll.u32 [#allocation2], 4
      %s21 = int_to_ptr.vmem [resolvable:$true] %s20
      %26 = dma.hbm_to_vmem [thread:$0]  %s19, 128, %s21, [#allocation3], 64, 64, 4
    $region5: #{tpu_custom_call.1} parent=1 // pred_fallthru
      _
    // Predicated region
    $region6: #{tpu_custom_call.1} parent=1 // pred_check
      _
    $region7: #{tpu_custom_call.1} parent=1 // pred_check_branch
      %28 = sbr.rel (0) target = $region9
    $region8: #{tpu_custom_call.1} parent=1 // pred_region
      %30 = vsyncadd [#allocation6], 0
      %s32 = sshll.u32 %s1, 4
      %s33 = int_to_ptr.hbm [resolvable:$true] %s32
      %s34 = sshll.u32 [#allocation5], 4
      %s35 = int_to_ptr.vmem [resolvable:$true] %s34
      %37 = dma.hbm_to_vmem [thread:$0]  %s33, 128, %s35, [#allocation6]
    $region9: #{tpu_custom_call.1} parent=1 // pred_fallthru
      _
    // Predicated region
    $region10: #{tpu_custom_call.1} parent=1 // pred_check
      _
    $region11: #{tpu_custom_call.1} parent=1 // pred_check_branch
      %39 = sbr.rel (0) target = $region13
    $region12: #{tpu_custom_call.1} parent=1 // pred_region
      %41 = vsyncadd [#allocation6], 0
      %s42 = sshll.u32 %s2, 4
      %s43 = int_to_ptr.hbm [resolvable:$true] %s42
      %s44 = sshll.u32 [#allocation7], 4
      %s45 = int_to_ptr.vmem [resolvable:$true] %s44
      %50 = dma.hbm_to_vmem [thread:$0]  %s43, 8192, %s45, [#allocation6], 512, 512, 32
    $region13: #{tpu_custom_call.1} parent=1 // pred_fallthru
      _
    // Predicated region
    $region14: #{tpu_custom_call.1} parent=1 // pred_check
      _
    $region15: #{tpu_custom_call.1} parent=1 // pred_check_branch
      %52 = sbr.rel (0) target = $region17
    $region16: #{tpu_custom_call.1} parent=1 // pred_region
      %54 = vsyncadd [#allocation9], 0
      %s55 = sshll.u32 %s3, 4
      %s56 = int_to_ptr.hbm [resolvable:$true] %s55
      %s57 = sshll.u32 [#allocation8], 4
      %s58 = int_to_ptr.vmem [resolvable:$true] %s57
      %63 = dma.hbm_to_vmem [thread:$0]  %s56, 8192, %s58, [#allocation9], 64, 64, 4
    $region17: #{tpu_custom_call.1} parent=1 // pred_fallthru
      _
    // Predicated region
    $region18: #{tpu_custom_call.1} parent=1 // pred_check
      _
    $region19: #{tpu_custom_call.1} parent=1 // pred_check_branch
      %65 = sbr.rel (0) target = $region21
    $region20: #{tpu_custom_call.1} parent=1 // pred_region
      _
    $region21: #{tpu_custom_call.1} parent=1 // pred_fallthru
      _
    // Predicated region
    $region22: #{tpu_custom_call.1} parent=1 // pred_check
      _
    $region23: #{tpu_custom_call.1} parent=1 // pred_check_branch
      %67 = sbr.rel (0) target = $region25
    $region24: #{tpu_custom_call.1} parent=1 // pred_region
      %69 = dma.done [#allocation3], 128
    $region25: #{tpu_custom_call.1} parent=1 // pred_fallthru
      _
    // Predicated region
    $region26: #{tpu_custom_call.1} parent=1 // pred_check
      _
    $region27: #{tpu_custom_call.1} parent=1 // pred_check_branch
      %71 = sbr.rel (0) target = $region29
    $region28: #{tpu_custom_call.1} parent=1 // pred_region
      %73 = dma.done [#allocation6], 128
    $region29: #{tpu_custom_call.1} parent=1 // pred_fallthru
      _
    // Predicated region
    $region30: #{tpu_custom_call.1} parent=1 // pred_check
      _
    $region31: #{tpu_custom_call.1} parent=1 // pred_check_branch
      %75 = sbr.rel (0) target = $region33
    $region32: #{tpu_custom_call.1} parent=1 // pred_region
      %77 = dma.done [#allocation6], 8192
    $region33: #{tpu_custom_call.1} parent=1 // pred_fallthru
      _
    // Predicated region
    $region34: #{tpu_custom_call.1} parent=1 // pred_check
      _
    $region35: #{tpu_custom_call.1} parent=1 // pred_check_branch
      %79 = sbr.rel (0) target = $region37
    $region36: #{tpu_custom_call.1} parent=1 // pred_region
      %81 = dma.done [#allocation9], 8192
    $region37: #{tpu_custom_call.1} parent=1 // pred_fallthru
      _
    %v82 = vld [vmem:[#allocation2] sm:$0xf]
    %v83 = vld [vmem:[#allocation2 + $0x4] sm:$0xf]
    %v84 = vld [vmem:[#allocation7] sm:$0xff]
    %v85 = vld [vmem:[#allocation7 + $0x8] sm:$0xff]
    %v86 = vld [vmem:[#allocation7 + $0x10] sm:$0xff]
    %v87 = vld [vmem:[#allocation7 + $0x18] sm:$0xff]
    %v88 = vld [vmem:[#allocation7 + $0x20] sm:$0xff]
    %v89 = vld [vmem:[#allocation7 + $0x28] sm:$0xff]
    %v90 = vld [vmem:[#allocation7 + $0x30] sm:$0xff]
    %v91 = vld [vmem:[#allocation7 + $0x38] sm:$0xff]
    %v92 = vld [vmem:[#allocation7 + $0x40] sm:$0xff]
    %v93 = vld [vmem:[#allocation7 + $0x48] sm:$0xff]
    %v94 = vld [vmem:[#allocation7 + $0x50] sm:$0xff]
    %v95 = vld [vmem:[#allocation7 + $0x58] sm:$0xff]
    %v96 = vld [vmem:[#allocation7 + $0x60] sm:$0xff]
    %v97 = vld [vmem:[#allocation7 + $0x68] sm:$0xff]
    %v98 = vld [vmem:[#allocation7 + $0x70] sm:$0xff]
    %v99 = vld [vmem:[#allocation7 + $0x78] sm:$0xff]
    %v100 = vld [vmem:[#allocation7 + $0x80] sm:$0xff]
    %v101 = vld [vmem:[#allocation7 + $0x88] sm:$0xff]
    %v102 = vld [vmem:[#allocation7 + $0x90] sm:$0xff]
    %v103 = vld [vmem:[#allocation7 + $0x98] sm:$0xff]
    %v104 = vld [vmem:[#allocation7 + $0xa0] sm:$0xff]
    %v105 = vld [vmem:[#allocation7 + $0xa8] sm:$0xff]
    %v106 = vld [vmem:[#allocation7 + $0xb0] sm:$0xff]
    %v107 = vld [vmem:[#allocation7 + $0xb8] sm:$0xff]
    %v108 = vld [vmem:[#allocation7 + $0xc0] sm:$0xff]
    %v109 = vld [vmem:[#allocation7 + $0xc8] sm:$0xff]
    %v110 = vld [vmem:[#allocation7 + $0xd0] sm:$0xff]
    %v111 = vld [vmem:[#allocation7 + $0xd8] sm:$0xff]
    %v112 = vld [vmem:[#allocation7 + $0xe0] sm:$0xff]
    %v113 = vld [vmem:[#allocation7 + $0xe8] sm:$0xff]
    %v114 = vld [vmem:[#allocation7 + $0xf0] sm:$0xff]
    %v115 = vld [vmem:[#allocation7 + $0xf8] sm:$0xff]
    %v116 = vld [vmem:[#allocation7 + $0x100] sm:$0xff]
    %v117 = vld [vmem:[#allocation7 + $0x108] sm:$0xff]
    %v118 = vld [vmem:[#allocation7 + $0x110] sm:$0xff]
    %v119 = vld [vmem:[#allocation7 + $0x118] sm:$0xff]
    %v120 = vld [vmem:[#allocation7 + $0x120] sm:$0xff]
    %v121 = vld [vmem:[#allocation7 + $0x128] sm:$0xff]
    %v122 = vld [vmem:[#allocation7 + $0x130] sm:$0xff]
    %v123 = vld [vmem:[#allocation7 + $0x138] sm:$0xff]
    %v124 = vld [vmem:[#allocation7 + $0x140] sm:$0xff]
    %v125 = vld [vmem:[#allocation7 + $0x148] sm:$0xff]
    %v126 = vld [vmem:[#allocation7 + $0x150] sm:$0xff]
    %v127 = vld [vmem:[#allocation7 + $0x158] sm:$0xff]
    %v128 = vld [vmem:[#allocation7 + $0x160] sm:$0xff]
    %v129 = vld [vmem:[#allocation7 + $0x168] sm:$0xff]
    %v130 = vld [vmem:[#allocation7 + $0x170] sm:$0xff]
    %v131 = vld [vmem:[#allocation7 + $0x178] sm:$0xff]
    %v132 = vld [vmem:[#allocation7 + $0x180] sm:$0xff]
    %v133 = vld [vmem:[#allocation7 + $0x188] sm:$0xff]
    %v134 = vld [vmem:[#allocation7 + $0x190] sm:$0xff]
    %v135 = vld [vmem:[#allocation7 + $0x198] sm:$0xff]
    %v136 = vld [vmem:[#allocation7 + $0x1a0] sm:$0xff]
    %v137 = vld [vmem:[#allocation7 + $0x1a8] sm:$0xff]
    %v138 = vld [vmem:[#allocation7 + $0x1b0] sm:$0xff]
    %v139 = vld [vmem:[#allocation7 + $0x1b8] sm:$0xff]
    %v140 = vld [vmem:[#allocation7 + $0x1c0] sm:$0xff]
    %v141 = vld [vmem:[#allocation7 + $0x1c8] sm:$0xff]
    %v142 = vld [vmem:[#allocation7 + $0x1d0] sm:$0xff]
    %v143 = vld [vmem:[#allocation7 + $0x1d8] sm:$0xff]
    %v144 = vld [vmem:[#allocation7 + $0x1e0] sm:$0xff]
    %v145 = vld [vmem:[#allocation7 + $0x1e8] sm:$0xff]
    %v146 = vld [vmem:[#allocation7 + $0x1f0] sm:$0xff]
    %v147 = vld [vmem:[#allocation7 + $0x1f8] sm:$0xff]
    %v148 = vld [vmem:[#allocation5] sm:$0xff]
    %v150 = vperm.slane %v148, 0
    %v151 = vperm.slane %v148, 1
    %v152 = vperm.slane %v148, 2
    %v153 = vperm.slane %v148, 3
    %v154 = vperm.slane %v148, 4
    %v155 = vperm.slane %v148, 5
    %v156 = vperm.slane %v148, 6
    %v157 = vperm.slane %v148, 7
    %v168 = vunpack.c.l.b16 %v82
    %v169 = vunpack.c.l.b16 %v83
    %v170 = vpack.c.b16 %v169, %v168
    %v236 = vunpack.c.l.b16 %v84
    %v237 = vunpack.c.h.b16 %v84
    %v238 = vunpack.c.l.b16 %v85
    %v239 = vunpack.c.h.b16 %v85
    %v240 = vunpack.c.l.b16 %v86
    %v241 = vunpack.c.h.b16 %v86
    %v242 = vunpack.c.l.b16 %v87
    %v243 = vunpack.c.h.b16 %v87
    %v244 = vunpack.c.l.b16 %v88
    %v245 = vunpack.c.h.b16 %v88
    %v246 = vunpack.c.l.b16 %v89
    %v247 = vunpack.c.h.b16 %v89
    %v248 = vunpack.c.l.b16 %v90
    %v249 = vunpack.c.h.b16 %v90
    %v250 = vunpack.c.l.b16 %v91
    %v251 = vunpack.c.h.b16 %v91
    %v252 = vunpack.c.l.b16 %v92
    %v253 = vunpack.c.h.b16 %v92
    %v254 = vunpack.c.l.b16 %v93
    %v255 = vunpack.c.h.b16 %v93
    %v256 = vunpack.c.l.b16 %v94
    %v257 = vunpack.c.h.b16 %v94
    %v258 = vunpack.c.l.b16 %v95
    %v259 = vunpack.c.h.b16 %v95
    %v260 = vunpack.c.l.b16 %v96
    %v261 = vunpack.c.h.b16 %v96
    %v262 = vunpack.c.l.b16 %v97
    %v263 = vunpack.c.h.b16 %v97
    %v264 = vunpack.c.l.b16 %v98
    %v265 = vunpack.c.h.b16 %v98
    %v266 = vunpack.c.l.b16 %v99
    %v267 = vunpack.c.h.b16 %v99
    %v268 = vunpack.c.l.b16 %v100
    %v269 = vunpack.c.h.b16 %v100
    %v270 = vunpack.c.l.b16 %v101
    %v271 = vunpack.c.h.b16 %v101
    %v272 = vunpack.c.l.b16 %v102
    %v273 = vunpack.c.h.b16 %v102
    %v274 = vunpack.c.l.b16 %v103
    %v275 = vunpack.c.h.b16 %v103
    %v276 = vunpack.c.l.b16 %v104
    %v277 = vunpack.c.h.b16 %v104
    %v278 = vunpack.c.l.b16 %v105
    %v279 = vunpack.c.h.b16 %v105
    %v280 = vunpack.c.l.b16 %v106
    %v281 = vunpack.c.h.b16 %v106
    %v282 = vunpack.c.l.b16 %v107
    %v283 = vunpack.c.h.b16 %v107
    %v284 = vunpack.c.l.b16 %v108
    %v285 = vunpack.c.h.b16 %v108
    %v286 = vunpack.c.l.b16 %v109
    %v287 = vunpack.c.h.b16 %v109
    %v288 = vunpack.c.l.b16 %v110
    %v289 = vunpack.c.h.b16 %v110
    %v290 = vunpack.c.l.b16 %v111
    %v291 = vunpack.c.h.b16 %v111
    %v292 = vunpack.c.l.b16 %v112
    %v293 = vunpack.c.h.b16 %v112
    %v294 = vunpack.c.l.b16 %v113
    %v295 = vunpack.c.h.b16 %v113
    %v296 = vunpack.c.l.b16 %v114
    %v297 = vunpack.c.h.b16 %v114
    %v298 = vunpack.c.l.b16 %v115
    %v299 = vunpack.c.h.b16 %v115
    %v300 = vunpack.c.l.b16 %v116
    %v301 = vunpack.c.h.b16 %v116
    %v302 = vunpack.c.l.b16 %v117
    %v303 = vunpack.c.h.b16 %v117
    %v304 = vunpack.c.l.b16 %v118
    %v305 = vunpack.c.h.b16 %v118
    %v306 = vunpack.c.l.b16 %v119
    %v307 = vunpack.c.h.b16 %v119
    %v308 = vunpack.c.l.b16 %v120
    %v309 = vunpack.c.h.b16 %v120
    %v310 = vunpack.c.l.b16 %v121
    %v311 = vunpack.c.h.b16 %v121
    %v312 = vunpack.c.l.b16 %v122
    %v313 = vunpack.c.h.b16 %v122
    %v314 = vunpack.c.l.b16 %v123
    %v315 = vunpack.c.h.b16 %v123
    %v316 = vunpack.c.l.b16 %v124
    %v317 = vunpack.c.h.b16 %v124
    %v318 = vunpack.c.l.b16 %v125
    %v319 = vunpack.c.h.b16 %v125
    %v320 = vunpack.c.l.b16 %v126
    %v321 = vunpack.c.h.b16 %v126
    %v322 = vunpack.c.l.b16 %v127
    %v323 = vunpack.c.h.b16 %v127
    %v324 = vunpack.c.l.b16 %v128
    %v325 = vunpack.c.h.b16 %v128
    %v326 = vunpack.c.l.b16 %v129
    %v327 = vunpack.c.h.b16 %v129
    %v328 = vunpack.c.l.b16 %v130
    %v329 = vunpack.c.h.b16 %v130
    %v330 = vunpack.c.l.b16 %v131
    %v331 = vunpack.c.h.b16 %v131
    %v332 = vunpack.c.l.b16 %v132
    %v333 = vunpack.c.h.b16 %v132
    %v334 = vunpack.c.l.b16 %v133
    %v335 = vunpack.c.h.b16 %v133
    %v336 = vunpack.c.l.b16 %v134
    %v337 = vunpack.c.h.b16 %v134
    %v338 = vunpack.c.l.b16 %v135
    %v339 = vunpack.c.h.b16 %v135
    %v340 = vunpack.c.l.b16 %v136
    %v341 = vunpack.c.h.b16 %v136
    %v342 = vunpack.c.l.b16 %v137
    %v343 = vunpack.c.h.b16 %v137
    %v344 = vunpack.c.l.b16 %v138
    %v345 = vunpack.c.h.b16 %v138
    %v346 = vunpack.c.l.b16 %v139
    %v347 = vunpack.c.h.b16 %v139
    %v348 = vunpack.c.l.b16 %v140
    %v349 = vunpack.c.h.b16 %v140
    %v350 = vunpack.c.l.b16 %v141
    %v351 = vunpack.c.h.b16 %v141
    %v352 = vunpack.c.l.b16 %v142
    %v353 = vunpack.c.h.b16 %v142
    %v354 = vunpack.c.l.b16 %v143
    %v355 = vunpack.c.h.b16 %v143
    %v356 = vunpack.c.l.b16 %v144
    %v357 = vunpack.c.h.b16 %v144
    %v358 = vunpack.c.l.b16 %v145
    %v359 = vunpack.c.h.b16 %v145
    %v360 = vunpack.c.l.b16 %v146
    %v361 = vunpack.c.h.b16 %v146
    %v362 = vunpack.c.l.b16 %v147
    %v363 = vunpack.c.h.b16 %v147
    %v364 = vpack.c.b16 %v244, %v236
    %v365 = vpack.c.b16 %v245, %v237
    %v366 = vpack.c.b16 %v246, %v238
    %v367 = vpack.c.b16 %v247, %v239
    %v368 = vpack.c.b16 %v248, %v240
    %v369 = vpack.c.b16 %v249, %v241
    %v370 = vpack.c.b16 %v250, %v242
    %v371 = vpack.c.b16 %v251, %v243
    %v372 = vpack.c.b16 %v260, %v252
    %v373 = vpack.c.b16 %v261, %v253
    %v374 = vpack.c.b16 %v262, %v254
    %v375 = vpack.c.b16 %v263, %v255
    %v376 = vpack.c.b16 %v264, %v256
    %v377 = vpack.c.b16 %v265, %v257
    %v378 = vpack.c.b16 %v266, %v258
    %v379 = vpack.c.b16 %v267, %v259
    %v380 = vpack.c.b16 %v276, %v268
    %v381 = vpack.c.b16 %v277, %v269
    %v382 = vpack.c.b16 %v278, %v270
    %v383 = vpack.c.b16 %v279, %v271
    %v384 = vpack.c.b16 %v280, %v272
    %v385 = vpack.c.b16 %v281, %v273
    %v386 = vpack.c.b16 %v282, %v274
    %v387 = vpack.c.b16 %v283, %v275
    %v388 = vpack.c.b16 %v292, %v284
    %v389 = vpack.c.b16 %v293, %v285
    %v390 = vpack.c.b16 %v294, %v286
    %v391 = vpack.c.b16 %v295, %v287
    %v392 = vpack.c.b16 %v296, %v288
    %v393 = vpack.c.b16 %v297, %v289
    %v394 = vpack.c.b16 %v298, %v290
    %v395 = vpack.c.b16 %v299, %v291
    %v396 = vpack.c.b16 %v308, %v300
    %v397 = vpack.c.b16 %v309, %v301
    %v398 = vpack.c.b16 %v310, %v302
    %v399 = vpack.c.b16 %v311, %v303
    %v400 = vpack.c.b16 %v312, %v304
    %v401 = vpack.c.b16 %v313, %v305
    %v402 = vpack.c.b16 %v314, %v306
    %v403 = vpack.c.b16 %v315, %v307
    %v404 = vpack.c.b16 %v324, %v316
    %v405 = vpack.c.b16 %v325, %v317
    %v406 = vpack.c.b16 %v326, %v318
    %v407 = vpack.c.b16 %v327, %v319
    %v408 = vpack.c.b16 %v328, %v320
    %v409 = vpack.c.b16 %v329, %v321
    %v410 = vpack.c.b16 %v330, %v322
    %v411 = vpack.c.b16 %v331, %v323
    %v412 = vpack.c.b16 %v340, %v332
    %v413 = vpack.c.b16 %v341, %v333
    %v414 = vpack.c.b16 %v342, %v334
    %v415 = vpack.c.b16 %v343, %v335
    %v416 = vpack.c.b16 %v344, %v336
    %v417 = vpack.c.b16 %v345, %v337
    %v418 = vpack.c.b16 %v346, %v338
    %v419 = vpack.c.b16 %v347, %v339
    %v420 = vpack.c.b16 %v356, %v348
    %v421 = vpack.c.b16 %v357, %v349
    %v422 = vpack.c.b16 %v358, %v350
    %v423 = vpack.c.b16 %v359, %v351
    %v424 = vpack.c.b16 %v360, %v352
    %v425 = vpack.c.b16 %v361, %v353
    %v426 = vpack.c.b16 %v362, %v354
    %v427 = vpack.c.b16 %v363, %v355
    %492 = vmatpush.bf16.msra.mxu0 %v420
    %493 = vmatpush.bf16.msra.mxu0 %v412
    %494 = vmatpush.bf16.msra.mxu0 %v404
    %495 = vmatpush.bf16.msra.mxu0 %v396
    %496 = vmatpush.bf16.msra.mxu0 %v388
    %497 = vmatpush.bf16.msra.mxu0 %v380
    %498 = vmatpush.bf16.msra.mxu0 %v372
    %499 = vmatpush.bf16.msra.mxu0 %v364
    %500 = vmatmul.bf16.gmra.mxu0 %v170
    %v501 = vpop.f32.mrf.mxu0
    %v502 = vadd.f32 %v150, %v501
    %v503 = vpop.f32.mrf.mxu0
    %v504 = vadd.f32 %v150, %v503
    %505 = vdwg.mxu0
    %506 = vmatpush.bf16.msra.mxu0 %v421
    %507 = vmatpush.bf16.msra.mxu0 %v413
    %508 = vmatpush.bf16.msra.mxu0 %v405
    %509 = vmatpush.bf16.msra.mxu0 %v397
    %510 = vmatpush.bf16.msra.mxu0 %v389
    %511 = vmatpush.bf16.msra.mxu0 %v381
    %512 = vmatpush.bf16.msra.mxu0 %v373
    %513 = vmatpush.bf16.msra.mxu0 %v365
    %514 = vmatmul.bf16.gmra.mxu0 %v170
    %v515 = vpop.f32.mrf.mxu0
    %v516 = vadd.f32 %v151, %v515
    %v517 = vpop.f32.mrf.mxu0
    %v518 = vadd.f32 %v151, %v517
    %519 = vdwg.mxu0
    %520 = vmatpush.bf16.msra.mxu0 %v422
    %521 = vmatpush.bf16.msra.mxu0 %v414
    %522 = vmatpush.bf16.msra.mxu0 %v406
    %523 = vmatpush.bf16.msra.mxu0 %v398
    %524 = vmatpush.bf16.msra.mxu0 %v390
    %525 = vmatpush.bf16.msra.mxu0 %v382
    %526 = vmatpush.bf16.msra.mxu0 %v374
    %527 = vmatpush.bf16.msra.mxu0 %v366
    %528 = vmatmul.bf16.gmra.mxu0 %v170
    %v529 = vpop.f32.mrf.mxu0
    %v530 = vadd.f32 %v152, %v529
    %v531 = vpop.f32.mrf.mxu0
    %v532 = vadd.f32 %v152, %v531
    %533 = vdwg.mxu0
    %534 = vmatpush.bf16.msra.mxu0 %v423
    %535 = vmatpush.bf16.msra.mxu0 %v415
    %536 = vmatpush.bf16.msra.mxu0 %v407
    %537 = vmatpush.bf16.msra.mxu0 %v399
    %538 = vmatpush.bf16.msra.mxu0 %v391
    %539 = vmatpush.bf16.msra.mxu0 %v383
    %540 = vmatpush.bf16.msra.mxu0 %v375
    %541 = vmatpush.bf16.msra.mxu0 %v367
    %542 = vmatmul.bf16.gmra.mxu0 %v170
    %v543 = vpop.f32.mrf.mxu0
    %v544 = vadd.f32 %v153, %v543
    %v545 = vpop.f32.mrf.mxu0
    %v546 = vadd.f32 %v153, %v545
    %547 = vdwg.mxu0
    %548 = vmatpush.bf16.msra.mxu0 %v424
    %549 = vmatpush.bf16.msra.mxu0 %v416
    %550 = vmatpush.bf16.msra.mxu0 %v408
    %551 = vmatpush.bf16.msra.mxu0 %v400
    %552 = vmatpush.bf16.msra.mxu0 %v392
    %553 = vmatpush.bf16.msra.mxu0 %v384
    %554 = vmatpush.bf16.msra.mxu0 %v376
    %555 = vmatpush.bf16.msra.mxu0 %v368
    %556 = vmatmul.bf16.gmra.mxu0 %v170
    %v557 = vpop.f32.mrf.mxu0
    %v558 = vadd.f32 %v154, %v557
    %v559 = vpop.f32.mrf.mxu0
    %v560 = vadd.f32 %v154, %v559
    %561 = vdwg.mxu0
    %562 = vmatpush.bf16.msra.mxu0 %v425
    %563 = vmatpush.bf16.msra.mxu0 %v417
    %564 = vmatpush.bf16.msra.mxu0 %v409
    %565 = vmatpush.bf16.msra.mxu0 %v401
    %566 = vmatpush.bf16.msra.mxu0 %v393
    %567 = vmatpush.bf16.msra.mxu0 %v385
    %568 = vmatpush.bf16.msra.mxu0 %v377
    %569 = vmatpush.bf16.msra.mxu0 %v369
    %570 = vmatmul.bf16.gmra.mxu0 %v170
    %v571 = vpop.f32.mrf.mxu0
    %v572 = vadd.f32 %v155, %v571
    %v573 = vpop.f32.mrf.mxu0
    %v574 = vadd.f32 %v155, %v573
    %575 = vdwg.mxu0
    %576 = vmatpush.bf16.msra.mxu0 %v426
    %577 = vmatpush.bf16.msra.mxu0 %v418
    %578 = vmatpush.bf16.msra.mxu0 %v410
    %579 = vmatpush.bf16.msra.mxu0 %v402
    %580 = vmatpush.bf16.msra.mxu0 %v394
    %581 = vmatpush.bf16.msra.mxu0 %v386
    %582 = vmatpush.bf16.msra.mxu0 %v378
    %583 = vmatpush.bf16.msra.mxu0 %v370
    %584 = vmatmul.bf16.gmra.mxu0 %v170
    %v585 = vpop.f32.mrf.mxu0
    %v586 = vadd.f32 %v156, %v585
    %v587 = vpop.f32.mrf.mxu0
    %v588 = vadd.f32 %v156, %v587
    %589 = vdwg.mxu0
    %590 = vmatpush.bf16.msra.mxu0 %v427
    %591 = vmatpush.bf16.msra.mxu0 %v419
    %592 = vmatpush.bf16.msra.mxu0 %v411
    %593 = vmatpush.bf16.msra.mxu0 %v403
    %594 = vmatpush.bf16.msra.mxu0 %v395
    %595 = vmatpush.bf16.msra.mxu0 %v387
    %596 = vmatpush.bf16.msra.mxu0 %v379
    %597 = vmatpush.bf16.msra.mxu0 %v371
    %598 = vmatmul.bf16.gmra.mxu0 %v170
    %v599 = vpop.f32.mrf.mxu0
    %v600 = vadd.f32 %v157, %v599
    %v601 = vpop.f32.mrf.mxu0
    %v602 = vadd.f32 %v157, %v601
    %603 = vdwg.mxu0
    %v604 = vmax.f32 %v502, 0.0
    %v605 = vmax.f32 %v516, 0.0
    %v606 = vmax.f32 %v530, 0.0
    %v607 = vmax.f32 %v544, 0.0
    %v608 = vmax.f32 %v558, 0.0
    %v609 = vmax.f32 %v572, 0.0
    %v610 = vmax.f32 %v586, 0.0
    %v611 = vmax.f32 %v600, 0.0
    %v612 = vmax.f32 %v504, 0.0
    %v613 = vmax.f32 %v518, 0.0
    %v614 = vmax.f32 %v532, 0.0
    %v615 = vmax.f32 %v546, 0.0
    %v616 = vmax.f32 %v560, 0.0
    %v617 = vmax.f32 %v574, 0.0
    %v618 = vmax.f32 %v588, 0.0
    %v619 = vmax.f32 %v602, 0.0
    %v620 = vadd.f32 %v604, %v605
    %v621 = vadd.f32 %v620, %v606
    %v622 = vadd.f32 %v621, %v607
    %v623 = vadd.f32 %v622, %v608
    %v624 = vadd.f32 %v623, %v609
    %v625 = vadd.f32 %v624, %v610
    %v626 = vadd.f32 %v625, %v611
    %627 = vadd.xlane.f32.xlu0 %v626
    %v628 = vpop.xlane.xlu0 %627
    %v629 = vadd.f32 %v612, %v613
    %v630 = vadd.f32 %v629, %v614
    %v631 = vadd.f32 %v630, %v615
    %v632 = vadd.f32 %v631, %v616
    %v633 = vadd.f32 %v632, %v617
    %v634 = vadd.f32 %v633, %v618
    %v635 = vadd.f32 %v634, %v619
    %636 = vadd.xlane.f32.xlu0 %v635
    %v637 = vpop.xlane.xlu0 %636
    %v638 = vmul.f32 %v604, %v604
    %v639 = vmul.f32 %v605, %v605
    %v640 = vmul.f32 %v606, %v606
    %v641 = vmul.f32 %v607, %v607
    %v642 = vmul.f32 %v608, %v608
    %v643 = vmul.f32 %v609, %v609
    %v644 = vmul.f32 %v610, %v610
    %v645 = vmul.f32 %v611, %v611
    %v646 = vmul.f32 %v612, %v612
    %v647 = vmul.f32 %v613, %v613
    %v648 = vmul.f32 %v614, %v614
    %v649 = vmul.f32 %v615, %v615
    %v650 = vmul.f32 %v616, %v616
    %v651 = vmul.f32 %v617, %v617
    %v652 = vmul.f32 %v618, %v618
    %v653 = vmul.f32 %v619, %v619
    %v654 = vadd.f32 %v638, %v639
    %v655 = vadd.f32 %v654, %v640
    %v656 = vadd.f32 %v655, %v641
    %v657 = vadd.f32 %v656, %v642
    %v658 = vadd.f32 %v657, %v643
    %v659 = vadd.f32 %v658, %v644
    %v660 = vadd.f32 %v659, %v645
    %661 = vadd.xlane.f32.xlu0 %v660
    %v662 = vpop.xlane.xlu0 %661
    %v663 = vadd.f32 %v646, %v647
    %v664 = vadd.f32 %v663, %v648
    %v665 = vadd.f32 %v664, %v649
    %v666 = vadd.f32 %v665, %v650
    %v667 = vadd.f32 %v666, %v651
    %v668 = vadd.f32 %v667, %v652
    %v669 = vadd.f32 %v668, %v653
    %670 = vadd.xlane.f32.xlu0 %v669
    %v671 = vpop.xlane.xlu0 %670
    %v672 = vmul.f32 %v628, 0.0009765625
    %v673 = vmul.f32 %v637, 0.0009765625
    %v674 = vmul.f32 %v662, 0.0009765625
    %v675 = vmul.f32 %v671, 0.0009765625
    %v676 = vmul.f32 %v672, %v672
    %v677 = vmul.f32 %v673, %v673
    %v678 = vsub.f32 %v674, %v676
    %v679 = vsub.f32 %v675, %v677
    %v680 = vmax.f32 %v678, 0.0
    %v681 = vmax.f32 %v679, 0.0
    %v682 = vsub.f32 %v604, %v672
    %v683 = vsub.f32 %v605, %v672
    %v684 = vsub.f32 %v606, %v672
    %v685 = vsub.f32 %v607, %v672
    %v686 = vsub.f32 %v608, %v672
    %v687 = vsub.f32 %v609, %v672
    %v688 = vsub.f32 %v610, %v672
    %v689 = vsub.f32 %v611, %v672
    %v690 = vsub.f32 %v612, %v673
    %v691 = vsub.f32 %v613, %v673
    %v692 = vsub.f32 %v614, %v673
    %v693 = vsub.f32 %v615, %v673
    %v694 = vsub.f32 %v616, %v673
    %v695 = vsub.f32 %v617, %v673
    %v696 = vsub.f32 %v618, %v673
    %v697 = vsub.f32 %v619, %v673
    %v698 = vadd.f32 %v680, 1e-05
    %v699 = vadd.f32 %v681, 1e-05
    %v700 = vrsqrt.pop %v698
    %v701 = vmul.f32 %v700, %v698
    %v702 = vmul.f32 %v701, %v700
    %v703 = vmul.f32 0.5, %v702
    %v704 = vsub.f32 1.5, %v703
    %v705 = vmul.f32 %v700, %v704
    %vm706 = vweird.f32 %v698
    %vm707 = vweird.f32 %v700
    %vm708 = vmor %vm706, %vm707
    %v709 = vsel %vm708, %v700, %v705
    %v710 = vrsqrt.pop %v699
    %v711 = vmul.f32 %v710, %v699
    %v712 = vmul.f32 %v711, %v710
    %v713 = vmul.f32 0.5, %v712
    %v714 = vsub.f32 1.5, %v713
    %v715 = vmul.f32 %v710, %v714
    %vm716 = vweird.f32 %v699
    %vm717 = vweird.f32 %v710
    %vm718 = vmor %vm716, %vm717
    %v719 = vsel %vm718, %v710, %v715
    %v720 = vmul.f32 %v682, %v709
    %v721 = vmul.f32 %v683, %v709
    %v722 = vmul.f32 %v684, %v709
    %v723 = vmul.f32 %v685, %v709
    %v724 = vmul.f32 %v686, %v709
    %v725 = vmul.f32 %v687, %v709
    %v726 = vmul.f32 %v688, %v709
    %v727 = vmul.f32 %v689, %v709
    %v728 = vmul.f32 %v690, %v719
    %v729 = vmul.f32 %v691, %v719
    %v730 = vmul.f32 %v692, %v719
    %v731 = vmul.f32 %v693, %v719
    %v732 = vmul.f32 %v694, %v719
    %v733 = vmul.f32 %v695, %v719
    %v734 = vmul.f32 %v696, %v719
    %v735 = vmul.f32 %v697, %v719
    %v736 = vpack.c.bf16 %v728, %v720
    %v737 = vpack.c.bf16 %v729, %v721
    %v738 = vpack.c.bf16 %v730, %v722
    %v739 = vpack.c.bf16 %v731, %v723
    %v740 = vpack.c.bf16 %v732, %v724
    %v741 = vpack.c.bf16 %v733, %v725
    %v742 = vpack.c.bf16 %v734, %v726
    %v743 = vpack.c.bf16 %v735, %v727
    %v744 = vld [vmem:[#allocation8] sm:$0xf]
    %v745 = vld [vmem:[#allocation8 + $0x4] sm:$0xf]
    %v746 = vld [vmem:[#allocation8 + $0x8] sm:$0xf]
    %v747 = vld [vmem:[#allocation8 + $0xc] sm:$0xf]
    %v748 = vld [vmem:[#allocation8 + $0x10] sm:$0xf]
    %v749 = vld [vmem:[#allocation8 + $0x14] sm:$0xf]
    %v750 = vld [vmem:[#allocation8 + $0x18] sm:$0xf]
    %v751 = vld [vmem:[#allocation8 + $0x1c] sm:$0xf]
    %v752 = vld [vmem:[#allocation8 + $0x20] sm:$0xf]
    %v753 = vld [vmem:[#allocation8 + $0x24] sm:$0xf]
    %v754 = vld [vmem:[#allocation8 + $0x28] sm:$0xf]
    %v755 = vld [vmem:[#allocation8 + $0x2c] sm:$0xf]
    %v756 = vld [vmem:[#allocation8 + $0x30] sm:$0xf]
    %v757 = vld [vmem:[#allocation8 + $0x34] sm:$0xf]
    %v758 = vld [vmem:[#allocation8 + $0x38] sm:$0xf]
    %v759 = vld [vmem:[#allocation8 + $0x3c] sm:$0xf]
    %v760 = vld [vmem:[#allocation8 + $0x40] sm:$0xf]
    %v761 = vld [vmem:[#allocation8 + $0x44] sm:$0xf]
    %v762 = vld [vmem:[#allocation8 + $0x48] sm:$0xf]
    %v763 = vld [vmem:[#allocation8 + $0x4c] sm:$0xf]
    %v764 = vld [vmem:[#allocation8 + $0x50] sm:$0xf]
    %v765 = vld [vmem:[#allocation8 + $0x54] sm:$0xf]
    %v766 = vld [vmem:[#allocation8 + $0x58] sm:$0xf]
    %v767 = vld [vmem:[#allocation8 + $0x5c] sm:$0xf]
    %v768 = vld [vmem:[#allocation8 + $0x60] sm:$0xf]
    %v769 = vld [vmem:[#allocation8 + $0x64] sm:$0xf]
    %v770 = vld [vmem:[#allocation8 + $0x68] sm:$0xf]
    %v771 = vld [vmem:[#allocation8 + $0x6c] sm:$0xf]
    %v772 = vld [vmem:[#allocation8 + $0x70] sm:$0xf]
    %v773 = vld [vmem:[#allocation8 + $0x74] sm:$0xf]
    %v774 = vld [vmem:[#allocation8 + $0x78] sm:$0xf]
    %v775 = vld [vmem:[#allocation8 + $0x7c] sm:$0xf]
    %v776 = vld [vmem:[#allocation8 + $0x80] sm:$0xf]
    %v777 = vld [vmem:[#allocation8 + $0x84] sm:$0xf]
    %v778 = vld [vmem:[#allocation8 + $0x88] sm:$0xf]
    %v779 = vld [vmem:[#allocation8 + $0x8c] sm:$0xf]
    %v780 = vld [vmem:[#allocation8 + $0x90] sm:$0xf]
    %v781 = vld [vmem:[#allocation8 + $0x94] sm:$0xf]
    %v782 = vld [vmem:[#allocation8 + $0x98] sm:$0xf]
    %v783 = vld [vmem:[#allocation8 + $0x9c] sm:$0xf]
    %v784 = vld [vmem:[#allocation8 + $0xa0] sm:$0xf]
    %v785 = vld [vmem:[#allocation8 + $0xa4] sm:$0xf]
    %v786 = vld [vmem:[#allocation8 + $0xa8] sm:$0xf]
    %v787 = vld [vmem:[#allocation8 + $0xac] sm:$0xf]
    %v788 = vld [vmem:[#allocation8 + $0xb0] sm:$0xf]
    %v789 = vld [vmem:[#allocation8 + $0xb4] sm:$0xf]
    %v790 = vld [vmem:[#allocation8 + $0xb8] sm:$0xf]
    %v791 = vld [vmem:[#allocation8 + $0xbc] sm:$0xf]
    %v792 = vld [vmem:[#allocation8 + $0xc0] sm:$0xf]
    %v793 = vld [vmem:[#allocation8 + $0xc4] sm:$0xf]
    %v794 = vld [vmem:[#allocation8 + $0xc8] sm:$0xf]
    %v795 = vld [vmem:[#allocation8 + $0xcc] sm:$0xf]
    %v796 = vld [vmem:[#allocation8 + $0xd0] sm:$0xf]
    %v797 = vld [vmem:[#allocation8 + $0xd4] sm:$0xf]
    %v798 = vld [vmem:[#allocation8 + $0xd8] sm:$0xf]
    %v799 = vld [vmem:[#allocation8 + $0xdc] sm:$0xf]
    %v800 = vld [vmem:[#allocation8 + $0xe0] sm:$0xf]
    %v801 = vld [vmem:[#allocation8 + $0xe4] sm:$0xf]
    %v802 = vld [vmem:[#allocation8 + $0xe8] sm:$0xf]
    %v803 = vld [vmem:[#allocation8 + $0xec] sm:$0xf]
    %v804 = vld [vmem:[#allocation8 + $0xf0] sm:$0xf]
    %v805 = vld [vmem:[#allocation8 + $0xf4] sm:$0xf]
    %v806 = vld [vmem:[#allocation8 + $0xf8] sm:$0xf]
    %v807 = vld [vmem:[#allocation8 + $0xfc] sm:$0xf]
    %v808 = vld [vmem:[#allocation8 + $0x100] sm:$0xf]
    %v809 = vld [vmem:[#allocation8 + $0x104] sm:$0xf]
    %v810 = vld [vmem:[#allocation8 + $0x108] sm:$0xf]
    %v811 = vld [vmem:[#allocation8 + $0x10c] sm:$0xf]
    %v812 = vld [vmem:[#allocation8 + $0x110] sm:$0xf]
    %v813 = vld [vmem:[#allocation8 + $0x114] sm:$0xf]
    %v814 = vld [vmem:[#allocation8 + $0x118] sm:$0xf]
    %v815 = vld [vmem:[#allocation8 + $0x11c] sm:$0xf]
    %v816 = vld [vmem:[#allocation8 + $0x120] sm:$0xf]
    %v817 = vld [vmem:[#allocation8 + $0x124] sm:$0xf]
    %v818 = vld [vmem:[#allocation8 + $0x128] sm:$0xf]
    %v819 = vld [vmem:[#allocation8 + $0x12c] sm:$0xf]
    %v820 = vld [vmem:[#allocation8 + $0x130] sm:$0xf]
    %v821 = vld [vmem:[#allocation8 + $0x134] sm:$0xf]
    %v822 = vld [vmem:[#allocation8 + $0x138] sm:$0xf]
    %v823 = vld [vmem:[#allocation8 + $0x13c] sm:$0xf]
    %v824 = vld [vmem:[#allocation8 + $0x140] sm:$0xf]
    %v825 = vld [vmem:[#allocation8 + $0x144] sm:$0xf]
    %v826 = vld [vmem:[#allocation8 + $0x148] sm:$0xf]
    %v827 = vld [vmem:[#allocation8 + $0x14c] sm:$0xf]
    %v828 = vld [vmem:[#allocation8 + $0x150] sm:$0xf]
    %v829 = vld [vmem:[#allocation8 + $0x154] sm:$0xf]
    %v830 = vld [vmem:[#allocation8 + $0x158] sm:$0xf]
    %v831 = vld [vmem:[#allocation8 + $0x15c] sm:$0xf]
    %v832 = vld [vmem:[#allocation8 + $0x160] sm:$0xf]
    %v833 = vld [vmem:[#allocation8 + $0x164] sm:$0xf]
    %v834 = vld [vmem:[#allocation8 + $0x168] sm:$0xf]
    %v835 = vld [vmem:[#allocation8 + $0x16c] sm:$0xf]
    %v836 = vld [vmem:[#allocation8 + $0x170] sm:$0xf]
    %v837 = vld [vmem:[#allocation8 + $0x174] sm:$0xf]
    %v838 = vld [vmem:[#allocation8 + $0x178] sm:$0xf]
    %v839 = vld [vmem:[#allocation8 + $0x17c] sm:$0xf]
    %v840 = vld [vmem:[#allocation8 + $0x180] sm:$0xf]
    %v841 = vld [vmem:[#allocation8 + $0x184] sm:$0xf]
    %v842 = vld [vmem:[#allocation8 + $0x188] sm:$0xf]
    %v843 = vld [vmem:[#allocation8 + $0x18c] sm:$0xf]
    %v844 = vld [vmem:[#allocation8 + $0x190] sm:$0xf]
    %v845 = vld [vmem:[#allocation8 + $0x194] sm:$0xf]
    %v846 = vld [vmem:[#allocation8 + $0x198] sm:$0xf]
    %v847 = vld [vmem:[#allocation8 + $0x19c] sm:$0xf]
    %v848 = vld [vmem:[#allocation8 + $0x1a0] sm:$0xf]
    %v849 = vld [vmem:[#allocation8 + $0x1a4] sm:$0xf]
    %v850 = vld [vmem:[#allocation8 + $0x1a8] sm:$0xf]
    %v851 = vld [vmem:[#allocation8 + $0x1ac] sm:$0xf]
    %v852 = vld [vmem:[#allocation8 + $0x1b0] sm:$0xf]
    %v853 = vld [vmem:[#allocation8 + $0x1b4] sm:$0xf]
    %v854 = vld [vmem:[#allocation8 + $0x1b8] sm:$0xf]
    %v855 = vld [vmem:[#allocation8 + $0x1bc] sm:$0xf]
    %v856 = vld [vmem:[#allocation8 + $0x1c0] sm:$0xf]
    %v857 = vld [vmem:[#allocation8 + $0x1c4] sm:$0xf]
    %v858 = vld [vmem:[#allocation8 + $0x1c8] sm:$0xf]
    %v859 = vld [vmem:[#allocation8 + $0x1cc] sm:$0xf]
    %v860 = vld [vmem:[#allocation8 + $0x1d0] sm:$0xf]
    %v861 = vld [vmem:[#allocation8 + $0x1d4] sm:$0xf]
    %v862 = vld [vmem:[#allocation8 + $0x1d8] sm:$0xf]
    %v863 = vld [vmem:[#allocation8 + $0x1dc] sm:$0xf]
    %v864 = vld [vmem:[#allocation8 + $0x1e0] sm:$0xf]
    %v865 = vld [vmem:[#allocation8 + $0x1e4] sm:$0xf]
    %v866 = vld [vmem:[#allocation8 + $0x1e8] sm:$0xf]
    %v867 = vld [vmem:[#allocation8 + $0x1ec] sm:$0xf]
    %v868 = vld [vmem:[#allocation8 + $0x1f0] sm:$0xf]
    %v869 = vld [vmem:[#allocation8 + $0x1f4] sm:$0xf]
    %v870 = vld [vmem:[#allocation8 + $0x1f8] sm:$0xf]
    %v871 = vld [vmem:[#allocation8 + $0x1fc] sm:$0xf]
    %v872 = vld [vmem:[%s4] sm:$0x1]
    %v874 = vperm.slane %v872, 0
    %v1004 = vunpack.c.l.b16 %v744
    %v1005 = vunpack.c.l.b16 %v745
    %v1006 = vunpack.c.l.b16 %v746
    %v1007 = vunpack.c.l.b16 %v747
    %v1008 = vunpack.c.l.b16 %v748
    %v1009 = vunpack.c.l.b16 %v749
    %v1010 = vunpack.c.l.b16 %v750
    %v1011 = vunpack.c.l.b16 %v751
    %v1012 = vunpack.c.l.b16 %v752
    %v1013 = vunpack.c.l.b16 %v753
    %v1014 = vunpack.c.l.b16 %v754
    %v1015 = vunpack.c.l.b16 %v755
    %v1016 = vunpack.c.l.b16 %v756
    %v1017 = vunpack.c.l.b16 %v757
    %v1018 = vunpack.c.l.b16 %v758
    %v1019 = vunpack.c.l.b16 %v759
    %v1020 = vunpack.c.l.b16 %v760
    %v1021 = vunpack.c.l.b16 %v761
    %v1022 = vunpack.c.l.b16 %v762
    %v1023 = vunpack.c.l.b16 %v763
    %v1024 = vunpack.c.l.b16 %v764
    %v1025 = vunpack.c.l.b16 %v765
    %v1026 = vunpack.c.l.b16 %v766
    %v1027 = vunpack.c.l.b16 %v767
    %v1028 = vunpack.c.l.b16 %v768
    %v1029 = vunpack.c.l.b16 %v769
    %v1030 = vunpack.c.l.b16 %v770
    %v1031 = vunpack.c.l.b16 %v771
    %v1032 = vunpack.c.l.b16 %v772
    %v1033 = vunpack.c.l.b16 %v773
    %v1034 = vunpack.c.l.b16 %v774
    %v1035 = vunpack.c.l.b16 %v775
    %v1036 = vunpack.c.l.b16 %v776
    %v1037 = vunpack.c.l.b16 %v777
    %v1038 = vunpack.c.l.b16 %v778
    %v1039 = vunpack.c.l.b16 %v779
    %v1040 = vunpack.c.l.b16 %v780
    %v1041 = vunpack.c.l.b16 %v781
    %v1042 = vunpack.c.l.b16 %v782
    %v1043 = vunpack.c.l.b16 %v783
    %v1044 = vunpack.c.l.b16 %v784
    %v1045 = vunpack.c.l.b16 %v785
    %v1046 = vunpack.c.l.b16 %v786
    %v1047 = vunpack.c.l.b16 %v787
    %v1048 = vunpack.c.l.b16 %v788
    %v1049 = vunpack.c.l.b16 %v789
    %v1050 = vunpack.c.l.b16 %v790
    %v1051 = vunpack.c.l.b16 %v791
    %v1052 = vunpack.c.l.b16 %v792
    %v1053 = vunpack.c.l.b16 %v793
    %v1054 = vunpack.c.l.b16 %v794
    %v1055 = vunpack.c.l.b16 %v795
    %v1056 = vunpack.c.l.b16 %v796
    %v1057 = vunpack.c.l.b16 %v797
    %v1058 = vunpack.c.l.b16 %v798
    %v1059 = vunpack.c.l.b16 %v799
    %v1060 = vunpack.c.l.b16 %v800
    %v1061 = vunpack.c.l.b16 %v801
    %v1062 = vunpack.c.l.b16 %v802
    %v1063 = vunpack.c.l.b16 %v803
    %v1064 = vunpack.c.l.b16 %v804
    %v1065 = vunpack.c.l.b16 %v805
    %v1066 = vunpack.c.l.b16 %v806
    %v1067 = vunpack.c.l.b16 %v807
    %v1068 = vunpack.c.l.b16 %v808
    %v1069 = vunpack.c.l.b16 %v809
    %v1070 = vunpack.c.l.b16 %v810
    %v1071 = vunpack.c.l.b16 %v811
    %v1072 = vunpack.c.l.b16 %v812
    %v1073 = vunpack.c.l.b16 %v813
    %v1074 = vunpack.c.l.b16 %v814
    %v1075 = vunpack.c.l.b16 %v815
    %v1076 = vunpack.c.l.b16 %v816
    %v1077 = vunpack.c.l.b16 %v817
    %v1078 = vunpack.c.l.b16 %v818
    %v1079 = vunpack.c.l.b16 %v819
    %v1080 = vunpack.c.l.b16 %v820
    %v1081 = vunpack.c.l.b16 %v821
    %v1082 = vunpack.c.l.b16 %v822
    %v1083 = vunpack.c.l.b16 %v823
    %v1084 = vunpack.c.l.b16 %v824
    %v1085 = vunpack.c.l.b16 %v825
    %v1086 = vunpack.c.l.b16 %v826
    %v1087 = vunpack.c.l.b16 %v827
    %v1088 = vunpack.c.l.b16 %v828
    %v1089 = vunpack.c.l.b16 %v829
    %v1090 = vunpack.c.l.b16 %v830
    %v1091 = vunpack.c.l.b16 %v831
    %v1092 = vunpack.c.l.b16 %v832
    %v1093 = vunpack.c.l.b16 %v833
    %v1094 = vunpack.c.l.b16 %v834
    %v1095 = vunpack.c.l.b16 %v835
    %v1096 = vunpack.c.l.b16 %v836
    %v1097 = vunpack.c.l.b16 %v837
    %v1098 = vunpack.c.l.b16 %v838
    %v1099 = vunpack.c.l.b16 %v839
    %v1100 = vunpack.c.l.b16 %v840
    %v1101 = vunpack.c.l.b16 %v841
    %v1102 = vunpack.c.l.b16 %v842
    %v1103 = vunpack.c.l.b16 %v843
    %v1104 = vunpack.c.l.b16 %v844
    %v1105 = vunpack.c.l.b16 %v845
    %v1106 = vunpack.c.l.b16 %v846
    %v1107 = vunpack.c.l.b16 %v847
    %v1108 = vunpack.c.l.b16 %v848
    %v1109 = vunpack.c.l.b16 %v849
    %v1110 = vunpack.c.l.b16 %v850
    %v1111 = vunpack.c.l.b16 %v851
    %v1112 = vunpack.c.l.b16 %v852
    %v1113 = vunpack.c.l.b16 %v853
    %v1114 = vunpack.c.l.b16 %v854
    %v1115 = vunpack.c.l.b16 %v855
    %v1116 = vunpack.c.l.b16 %v856
    %v1117 = vunpack.c.l.b16 %v857
    %v1118 = vunpack.c.l.b16 %v858
    %v1119 = vunpack.c.l.b16 %v859
    %v1120 = vunpack.c.l.b16 %v860
    %v1121 = vunpack.c.l.b16 %v861
    %v1122 = vunpack.c.l.b16 %v862
    %v1123 = vunpack.c.l.b16 %v863
    %v1124 = vunpack.c.l.b16 %v864
    %v1125 = vunpack.c.l.b16 %v865
    %v1126 = vunpack.c.l.b16 %v866
    %v1127 = vunpack.c.l.b16 %v867
    %v1128 = vunpack.c.l.b16 %v868
    %v1129 = vunpack.c.l.b16 %v869
    %v1130 = vunpack.c.l.b16 %v870
    %v1131 = vunpack.c.l.b16 %v871
    %v1132 = vpack.c.b16 %v1005, %v1004
    %v1133 = vpack.c.b16 %v1007, %v1006
    %v1134 = vpack.c.b16 %v1009, %v1008
    %v1135 = vpack.c.b16 %v1011, %v1010
    %v1136 = vpack.c.b16 %v1013, %v1012
    %v1137 = vpack.c.b16 %v1015, %v1014
    %v1138 = vpack.c.b16 %v1017, %v1016
    %v1139 = vpack.c.b16 %v1019, %v1018
    %v1140 = vpack.c.b16 %v1021, %v1020
    %v1141 = vpack.c.b16 %v1023, %v1022
    %v1142 = vpack.c.b16 %v1025, %v1024
    %v1143 = vpack.c.b16 %v1027, %v1026
    %v1144 = vpack.c.b16 %v1029, %v1028
    %v1145 = vpack.c.b16 %v1031, %v1030
    %v1146 = vpack.c.b16 %v1033, %v1032
    %v1147 = vpack.c.b16 %v1035, %v1034
    %v1148 = vpack.c.b16 %v1037, %v1036
    %v1149 = vpack.c.b16 %v1039, %v1038
    %v1150 = vpack.c.b16 %v1041, %v1040
    %v1151 = vpack.c.b16 %v1043, %v1042
    %v1152 = vpack.c.b16 %v1045, %v1044
    %v1153 = vpack.c.b16 %v1047, %v1046
    %v1154 = vpack.c.b16 %v1049, %v1048
    %v1155 = vpack.c.b16 %v1051, %v1050
    %v1156 = vpack.c.b16 %v1053, %v1052
    %v1157 = vpack.c.b16 %v1055, %v1054
    %v1158 = vpack.c.b16 %v1057, %v1056
    %v1159 = vpack.c.b16 %v1059, %v1058
    %v1160 = vpack.c.b16 %v1061, %v1060
    %v1161 = vpack.c.b16 %v1063, %v1062
    %v1162 = vpack.c.b16 %v1065, %v1064
    %v1163 = vpack.c.b16 %v1067, %v1066
    %v1164 = vpack.c.b16 %v1069, %v1068
    %v1165 = vpack.c.b16 %v1071, %v1070
    %v1166 = vpack.c.b16 %v1073, %v1072
    %v1167 = vpack.c.b16 %v1075, %v1074
    %v1168 = vpack.c.b16 %v1077, %v1076
    %v1169 = vpack.c.b16 %v1079, %v1078
    %v1170 = vpack.c.b16 %v1081, %v1080
    %v1171 = vpack.c.b16 %v1083, %v1082
    %v1172 = vpack.c.b16 %v1085, %v1084
    %v1173 = vpack.c.b16 %v1087, %v1086
    %v1174 = vpack.c.b16 %v1089, %v1088
    %v1175 = vpack.c.b16 %v1091, %v1090
    %v1176 = vpack.c.b16 %v1093, %v1092
    %v1177 = vpack.c.b16 %v1095, %v1094
    %v1178 = vpack.c.b16 %v1097, %v1096
    %v1179 = vpack.c.b16 %v1099, %v1098
    %v1180 = vpack.c.b16 %v1101, %v1100
    %v1181 = vpack.c.b16 %v1103, %v1102
    %v1182 = vpack.c.b16 %v1105, %v1104
    %v1183 = vpack.c.b16 %v1107, %v1106
    %v1184 = vpack.c.b16 %v1109, %v1108
    %v1185 = vpack.c.b16 %v1111, %v1110
    %v1186 = vpack.c.b16 %v1113, %v1112
    %v1187 = vpack.c.b16 %v1115, %v1114
    %v1188 = vpack.c.b16 %v1117, %v1116
    %v1189 = vpack.c.b16 %v1119, %v1118
    %v1190 = vpack.c.b16 %v1121, %v1120
    %v1191 = vpack.c.b16 %v1123, %v1122
    %v1192 = vpack.c.b16 %v1125, %v1124
    %v1193 = vpack.c.b16 %v1127, %v1126
    %v1194 = vpack.c.b16 %v1129, %v1128
    %v1195 = vpack.c.b16 %v1131, %v1130
    %1260 = vmatpush.bf16.msra.mxu0 %v1139
    %1261 = vmatpush.bf16.msra.mxu0 %v1138
    %1262 = vmatpush.bf16.msra.mxu0 %v1137
    %1263 = vmatpush.bf16.msra.mxu0 %v1136
    %1264 = vmatpush.bf16.msra.mxu0 %v1135
    %1265 = vmatpush.bf16.msra.mxu0 %v1134
    %1266 = vmatpush.bf16.msra.mxu0 %v1133
    %1267 = vmatpush.bf16.msra.mxu0 %v1132
    %1268 = vmatmul.bf16.gmra.mxu0 %v736
    %v1269 = vpop.f32.mrf.mxu0
    %v1270 = vadd.f32 %v874, %v1269
    %v1271 = vpop.f32.mrf.mxu0
    %v1272 = vadd.f32 %v874, %v1271
    %1273 = vdwg.mxu0
    %1274 = vmatpush.bf16.msra.mxu0 %v1147
    %1275 = vmatpush.bf16.msra.mxu0 %v1146
    %1276 = vmatpush.bf16.msra.mxu0 %v1145
    %1277 = vmatpush.bf16.msra.mxu0 %v1144
    %1278 = vmatpush.bf16.msra.mxu0 %v1143
    %1279 = vmatpush.bf16.msra.mxu0 %v1142
    %1280 = vmatpush.bf16.msra.mxu0 %v1141
    %1281 = vmatpush.bf16.msra.mxu0 %v1140
    %1282 = vmatmul.bf16.gmra.mxu0 %v737
    %v1283 = vpop.f32.mrf.mxu0
    %v1284 = vadd.f32 %v1270, %v1283
    %v1285 = vpop.f32.mrf.mxu0
    %v1286 = vadd.f32 %v1272, %v1285
    %1287 = vdwg.mxu0
    %1288 = vmatpush.bf16.msra.mxu0 %v1155
    %1289 = vmatpush.bf16.msra.mxu0 %v1154
    %1290 = vmatpush.bf16.msra.mxu0 %v1153
    %1291 = vmatpush.bf16.msra.mxu0 %v1152
    %1292 = vmatpush.bf16.msra.mxu0 %v1151
    %1293 = vmatpush.bf16.msra.mxu0 %v1150
    %1294 = vmatpush.bf16.msra.mxu0 %v1149
    %1295 = vmatpush.bf16.msra.mxu0 %v1148
    %1296 = vmatmul.bf16.gmra.mxu0 %v738
    %v1297 = vpop.f32.mrf.mxu0
    %v1298 = vadd.f32 %v1284, %v1297
    %v1299 = vpop.f32.mrf.mxu0
    %v1300 = vadd.f32 %v1286, %v1299
    %1301 = vdwg.mxu0
    %1302 = vmatpush.bf16.msra.mxu0 %v1163
    %1303 = vmatpush.bf16.msra.mxu0 %v1162
    %1304 = vmatpush.bf16.msra.mxu0 %v1161
    %1305 = vmatpush.bf16.msra.mxu0 %v1160
    %1306 = vmatpush.bf16.msra.mxu0 %v1159
    %1307 = vmatpush.bf16.msra.mxu0 %v1158
    %1308 = vmatpush.bf16.msra.mxu0 %v1157
    %1309 = vmatpush.bf16.msra.mxu0 %v1156
    %1310 = vmatmul.bf16.gmra.mxu0 %v739
    %v1311 = vpop.f32.mrf.mxu0
    %v1312 = vadd.f32 %v1298, %v1311
    %v1313 = vpop.f32.mrf.mxu0
    %v1314 = vadd.f32 %v1300, %v1313
    %1315 = vdwg.mxu0
    %1316 = vmatpush.bf16.msra.mxu0 %v1171
    %1317 = vmatpush.bf16.msra.mxu0 %v1170
    %1318 = vmatpush.bf16.msra.mxu0 %v1169
    %1319 = vmatpush.bf16.msra.mxu0 %v1168
    %1320 = vmatpush.bf16.msra.mxu0 %v1167
    %1321 = vmatpush.bf16.msra.mxu0 %v1166
    %1322 = vmatpush.bf16.msra.mxu0 %v1165
    %1323 = vmatpush.bf16.msra.mxu0 %v1164
    %1324 = vmatmul.bf16.gmra.mxu0 %v740
    %v1325 = vpop.f32.mrf.mxu0
    %v1326 = vadd.f32 %v1312, %v1325
    %v1327 = vpop.f32.mrf.mxu0
    %v1328 = vadd.f32 %v1314, %v1327
    %1329 = vdwg.mxu0
    %1330 = vmatpush.bf16.msra.mxu0 %v1179
    %1331 = vmatpush.bf16.msra.mxu0 %v1178
    %1332 = vmatpush.bf16.msra.mxu0 %v1177
    %1333 = vmatpush.bf16.msra.mxu0 %v1176
    %1334 = vmatpush.bf16.msra.mxu0 %v1175
    %1335 = vmatpush.bf16.msra.mxu0 %v1174
    %1336 = vmatpush.bf16.msra.mxu0 %v1173
    %1337 = vmatpush.bf16.msra.mxu0 %v1172
    %1338 = vmatmul.bf16.gmra.mxu0 %v741
    %v1339 = vpop.f32.mrf.mxu0
    %v1340 = vadd.f32 %v1326, %v1339
    %v1341 = vpop.f32.mrf.mxu0
    %v1342 = vadd.f32 %v1328, %v1341
    %1343 = vdwg.mxu0
    %1344 = vmatpush.bf16.msra.mxu0 %v1187
    %1345 = vmatpush.bf16.msra.mxu0 %v1186
    %1346 = vmatpush.bf16.msra.mxu0 %v1185
    %1347 = vmatpush.bf16.msra.mxu0 %v1184
    %1348 = vmatpush.bf16.msra.mxu0 %v1183
    %1349 = vmatpush.bf16.msra.mxu0 %v1182
    %1350 = vmatpush.bf16.msra.mxu0 %v1181
    %1351 = vmatpush.bf16.msra.mxu0 %v1180
    %1352 = vmatmul.bf16.gmra.mxu0 %v742
    %v1353 = vpop.f32.mrf.mxu0
    %v1354 = vadd.f32 %v1340, %v1353
    %v1355 = vpop.f32.mrf.mxu0
    %v1356 = vadd.f32 %v1342, %v1355
    %1357 = vdwg.mxu0
    %1358 = vmatpush.bf16.msra.mxu0 %v1195
    %1359 = vmatpush.bf16.msra.mxu0 %v1194
    %1360 = vmatpush.bf16.msra.mxu0 %v1193
    %1361 = vmatpush.bf16.msra.mxu0 %v1192
    %1362 = vmatpush.bf16.msra.mxu0 %v1191
    %1363 = vmatpush.bf16.msra.mxu0 %v1190
    %1364 = vmatpush.bf16.msra.mxu0 %v1189
    %1365 = vmatpush.bf16.msra.mxu0 %v1188
    %1366 = vmatmul.bf16.gmra.mxu0 %v743
    %v1367 = vpop.f32.mrf.mxu0
    %v1368 = vadd.f32 %v1354, %v1367
    %v1369 = vpop.f32.mrf.mxu0
    %v1370 = vadd.f32 %v1356, %v1369
    %1371 = vdwg.mxu0
    %v1372 = vpack.c.bf16 %v1368, %v1368
    %v1373 = vpack.c.bf16 %v1370, %v1370
    %1374 = vst [vmem:[#allocation10] sm:$0xf] %v1372
    %1375 = vst [vmem:[#allocation10 + $0x4] sm:$0xf] %v1373
    // Predicated region
    $region38: #{tpu_custom_call.1} parent=1 // pred_check
      _
    $region39: #{tpu_custom_call.1} parent=1 // pred_check_branch
      %1377 = sbr.rel (0) target = $region41
    $region40: #{tpu_custom_call.1} parent=1 // pred_region
      %1379 = vsyncadd [#allocation4], 0
      %s1380 = sshll.u32 [#allocation10], 4
      %s1381 = int_to_ptr.vmem [resolvable:$true] %s1380
      %s1382 = sshll.u32 %s5, 4
      %s1383 = int_to_ptr.hbm [resolvable:$true] %s1382
      %1388 = dma.vmem_to_hbm [thread:$0]  %s1381, 128, %s1383, [#allocation4], 64, 64, 4
    $region41: #{tpu_custom_call.1} parent=1 // pred_fallthru
      _
    // Predicated region
    $region42: #{tpu_custom_call.1} parent=1 // pred_check
      _
    $region43: #{tpu_custom_call.1} parent=1 // pred_check_branch
      %1390 = sbr.rel (0) target = $region45
    $region44: #{tpu_custom_call.1} parent=1 // pred_region
      %1392 = dma.done [#allocation4], 128
    $region45: #{tpu_custom_call.1} parent=1 // pred_fallthru
      _
    %1393 = vsyncpa [#allocation3], 1
    %1394 = vsyncpa [#allocation6], 1
    %1395 = vsyncpa [#allocation9], 1
    %1396 = vsyncpa [#allocation4], 1

// kernel: tpu_custom_call.1
$region0: #{tpu_custom_call.1}
  #allocation0 [shape = 'u32[]', space=smem, size = 0x4, offset = 0x4, fixed_abs, tag = 'smem constant byte address 0x4 - core index']
  #allocation1 [shape = 'u32[72,128]{1,0:T(1,128)}', space=vmem, size = 0x9000, scoped, tag = 'internal scratch']
  %s0 = inlined_call_operand.hbm [shape: bf16[16,128], index: 0, kind: input, shape index: {}]
  %s1 = inlined_call_operand.hbm [shape: f32[1,1024], index: 1, kind: input, shape index: {}]
  %s2 = inlined_call_operand.hbm [shape: bf16[128,1024], index: 2, kind: input, shape index: {}]
  %s3 = inlined_call_operand.hbm [shape: bf16[1024,128], index: 3, kind: input, shape index: {}]
  %s4 = inlined_call_operand.vmem [shape: f32[1,128], index: 4, kind: input, shape index: {}]
  %s5 = inlined_call_operand.hbm [shape: bf16[16,128], index: 5, kind: output, shape index: {}]
  %s6 = sld [smem:[#allocation0]]
  $region46: #{tpu_custom_call.1} parent=0
    _
  %s8 = ssub.s32 1, %s6
  %s9 = scalar_select 0, %s8, %s6
  $region1: #{tpu_custom_call.1} parent=0
    #allocation2 [shape = 'u8[4096]{0}', space=vmem, size = 0x1000, scoped, tag = 'input window, operand 0, single buffered']
    #allocation3 [shape = 's32[1]{0}', space=sflag, size = 0x4, scoped, tag = 'scoped memory for tpu_custom_call.1']
    #allocation4 [shape = 's32[1]{0}', space=sflag, size = 0x4, scoped, tag = 'scoped memory for tpu_custom_call.1']
    #allocation5 [shape = 'u8[4096]{0}', space=vmem, size = 0x1000, scoped, tag = 'input window, operand 1, single buffered']
    #allocation6 [shape = 's32[1]{0}', space=sflag, size = 0x4, scoped, tag = 'scoped memory for tpu_custom_call.1']
    #allocation7 [shape = 'u8[262144]{0}', space=vmem, size = 0x40000, scoped, tag = 'input window, operand 2, single buffered']
    #allocation8 [shape = 'u8[262144]{0}', space=vmem, size = 0x40000, scoped, tag = 'input window, operand 3, single buffered']
    #allocation9 [shape = 's32[1]{0}', space=sflag, size = 0x4, scoped, tag = 'scoped memory for tpu_custom_call.1']
    #allocation10 [shape = 'u8[4096]{0}', space=vmem, size = 0x1000, scoped, tag = 'output window, operand 0, single buffered']
    %10 = vsyncpa [#allocation3], 0
    %11 = vsyncpa [#allocation6], 0
    %12 = vsyncpa [#allocation9], 0
    %13 = vsyncpa [#allocation4], 0
    // Predicated region
    $region2: #{tpu_custom_call.1} parent=1 // pred_check
      _
    $region3: #{tpu_custom_call.1} parent=1 // pred_check_branch
      %15 = sbr.rel (0) target = $region5
    $region4: #{tpu_custom_call.1} parent=1 // pred_region
      %17 = vsyncadd [#allocation3], 0
      %s18 = sshll.u32 %s0, 4
      %s19 = int_to_ptr.hbm [resolvable:$true] %s18
      %s20 = sshll.u32 [#allocation2], 4
      %s21 = int_to_ptr.vmem [resolvable:$true] %s20
      %26 = dma.hbm_to_vmem [thread:$0]  %s19, 128, %s21, [#allocation3], 64, 64, 4
    $region5: #{tpu_custom_call.1} parent=1 // pred_fallthru
      _
    // Predicated region
    $region6: #{tpu_custom_call.1} parent=1 // pred_check
      _
    $region7: #{tpu_custom_call.1} parent=1 // pred_check_branch
      %28 = sbr.rel (0) target = $region9
    $region8: #{tpu_custom_call.1} parent=1 // pred_region
      %30 = vsyncadd [#allocation6], 0
      %s32 = sshll.u32 %s1, 4
      %s33 = int_to_ptr.hbm [resolvable:$true] %s32
      %s34 = sshll.u32 [#allocation5], 4
      %s35 = int_to_ptr.vmem [resolvable:$true] %s34
      %37 = dma.hbm_to_vmem [thread:$0]  %s33, 128, %s35, [#allocation6]
    $region9: #{tpu_custom_call.1} parent=1 // pred_fallthru
      _
    // Predicated region
    $region10: #{tpu_custom_call.1} parent=1 // pred_check
      _
    $region11: #{tpu_custom_call.1} parent=1 // pred_check_branch
      %39 = sbr.rel (0) target = $region13
    $region12: #{tpu_custom_call.1} parent=1 // pred_region
      %41 = vsyncadd [#allocation6], 0
      %s42 = sshll.u32 %s2, 4
      %s43 = int_to_ptr.hbm [resolvable:$true] %s42
      %s44 = sshll.u32 [#allocation7], 4
      %s45 = int_to_ptr.vmem [resolvable:$true] %s44
      %50 = dma.hbm_to_vmem [thread:$0]  %s43, 8192, %s45, [#allocation6], 512, 512, 32
    $region13: #{tpu_custom_call.1} parent=1 // pred_fallthru
      _
    // Predicated region
    $region14: #{tpu_custom_call.1} parent=1 // pred_check
      _
    $region15: #{tpu_custom_call.1} parent=1 // pred_check_branch
      %52 = sbr.rel (0) target = $region17
    $region16: #{tpu_custom_call.1} parent=1 // pred_region
      %54 = vsyncadd [#allocation9], 0
      %s55 = sshll.u32 %s3, 4
      %s56 = int_to_ptr.hbm [resolvable:$true] %s55
      %s57 = sshll.u32 [#allocation8], 4
      %s58 = int_to_ptr.vmem [resolvable:$true] %s57
      %63 = dma.hbm_to_vmem [thread:$0]  %s56, 8192, %s58, [#allocation9], 64, 64, 4
    $region17: #{tpu_custom_call.1} parent=1 // pred_fallthru
      _
    // Predicated region
    $region18: #{tpu_custom_call.1} parent=1 // pred_check
      _
    $region19: #{tpu_custom_call.1} parent=1 // pred_check_branch
      %65 = sbr.rel (0) target = $region21
    $region20: #{tpu_custom_call.1} parent=1 // pred_region
      _
    $region21: #{tpu_custom_call.1} parent=1 // pred_fallthru
      _
    // Predicated region
    $region22: #{tpu_custom_call.1} parent=1 // pred_check
      _
    $region23: #{tpu_custom_call.1} parent=1 // pred_check_branch
      %67 = sbr.rel (0) target = $region25
    $region24: #{tpu_custom_call.1} parent=1 // pred_region
      %69 = dma.done [#allocation3], 128
    $region25: #{tpu_custom_call.1} parent=1 // pred_fallthru
      _
    // Predicated region
    $region26: #{tpu_custom_call.1} parent=1 // pred_check
      _
    $region27: #{tpu_custom_call.1} parent=1 // pred_check_branch
      %71 = sbr.rel (0) target = $region29
    $region28: #{tpu_custom_call.1} parent=1 // pred_region
      %73 = dma.done [#allocation6], 128
    $region29: #{tpu_custom_call.1} parent=1 // pred_fallthru
      _
    // Predicated region
    $region30: #{tpu_custom_call.1} parent=1 // pred_check
      _
    $region31: #{tpu_custom_call.1} parent=1 // pred_check_branch
      %75 = sbr.rel (0) target = $region33
    $region32: #{tpu_custom_call.1} parent=1 // pred_region
      %77 = dma.done [#allocation6], 8192
    $region33: #{tpu_custom_call.1} parent=1 // pred_fallthru
      _
    // Predicated region
    $region34: #{tpu_custom_call.1} parent=1 // pred_check
      _
    $region35: #{tpu_custom_call.1} parent=1 // pred_check_branch
      %79 = sbr.rel (0) target = $region37
    $region36: #{tpu_custom_call.1} parent=1 // pred_region
      %81 = dma.done [#allocation9], 8192
    $region37: #{tpu_custom_call.1} parent=1 // pred_fallthru
      _
    %v82 = vld [vmem:[#allocation2] sm:$0xf]
    %v83 = vld [vmem:[#allocation2 + $0x4] sm:$0xf]
    %v84 = vld [vmem:[#allocation7] sm:$0xff]
    %v85 = vld [vmem:[#allocation7 + $0x8] sm:$0xff]
    %v86 = vld [vmem:[#allocation7 + $0x10] sm:$0xff]
    %v87 = vld [vmem:[#allocation7 + $0x18] sm:$0xff]
    %v88 = vld [vmem:[#allocation7 + $0x20] sm:$0xff]
    %v89 = vld [vmem:[#allocation7 + $0x28] sm:$0xff]
    %v90 = vld [vmem:[#allocation7 + $0x30] sm:$0xff]
    %v91 = vld [vmem:[#allocation7 + $0x38] sm:$0xff]
    %v92 = vld [vmem:[#allocation7 + $0x40] sm:$0xff]
    %v93 = vld [vmem:[#allocation7 + $0x48] sm:$0xff]
    %v94 = vld [vmem:[#allocation7 + $0x50] sm:$0xff]
    %v95 = vld [vmem:[#allocation7 + $0x58] sm:$0xff]
    %v96 = vld [vmem:[#allocation7 + $0x60] sm:$0xff]
    %v97 = vld [vmem:[#allocation7 + $0x68] sm:$0xff]
    %v98 = vld [vmem:[#allocation7 + $0x70] sm:$0xff]
    %v99 = vld [vmem:[#allocation7 + $0x78] sm:$0xff]
    %v100 = vld [vmem:[#allocation7 + $0x80] sm:$0xff]
    %v101 = vld [vmem:[#allocation7 + $0x88] sm:$0xff]
    %v102 = vld [vmem:[#allocation7 + $0x90] sm:$0xff]
    %v103 = vld [vmem:[#allocation7 + $0x98] sm:$0xff]
    %v104 = vld [vmem:[#allocation7 + $0xa0] sm:$0xff]
    %v105 = vld [vmem:[#allocation7 + $0xa8] sm:$0xff]
    %v106 = vld [vmem:[#allocation7 + $0xb0] sm:$0xff]
    %v107 = vld [vmem:[#allocation7 + $0xb8] sm:$0xff]
    %v108 = vld [vmem:[#allocation7 + $0xc0] sm:$0xff]
    %v109 = vld [vmem:[#allocation7 + $0xc8] sm:$0xff]
    %v110 = vld [vmem:[#allocation7 + $0xd0] sm:$0xff]
    %v111 = vld [vmem:[#allocation7 + $0xd8] sm:$0xff]
    %v112 = vld [vmem:[#allocation7 + $0xe0] sm:$0xff]
    %v113 = vld [vmem:[#allocation7 + $0xe8] sm:$0xff]
    %v114 = vld [vmem:[#allocation7 + $0xf0] sm:$0xff]
    %v115 = vld [vmem:[#allocation7 + $0xf8] sm:$0xff]
    %v116 = vld [vmem:[#allocation7 + $0x100] sm:$0xff]
    %v117 = vld [vmem:[#allocation7 + $0x108] sm:$0xff]
    %v118 = vld [vmem:[#allocation7 + $0x110] sm:$0xff]
    %v119 = vld [vmem:[#allocation7 + $0x118] sm:$0xff]
    %v120 = vld [vmem:[#allocation7 + $0x120] sm:$0xff]
    %v121 = vld [vmem:[#allocation7 + $0x128] sm:$0xff]
    %v122 = vld [vmem:[#allocation7 + $0x130] sm:$0xff]
    %v123 = vld [vmem:[#allocation7 + $0x138] sm:$0xff]
    %v124 = vld [vmem:[#allocation7 + $0x140] sm:$0xff]
    %v125 = vld [vmem:[#allocation7 + $0x148] sm:$0xff]
    %v126 = vld [vmem:[#allocation7 + $0x150] sm:$0xff]
    %v127 = vld [vmem:[#allocation7 + $0x158] sm:$0xff]
    %v128 = vld [vmem:[#allocation7 + $0x160] sm:$0xff]
    %v129 = vld [vmem:[#allocation7 + $0x168] sm:$0xff]
    %v130 = vld [vmem:[#allocation7 + $0x170] sm:$0xff]
    %v131 = vld [vmem:[#allocation7 + $0x178] sm:$0xff]
    %v132 = vld [vmem:[#allocation7 + $0x180] sm:$0xff]
    %v133 = vld [vmem:[#allocation7 + $0x188] sm:$0xff]
    %v134 = vld [vmem:[#allocation7 + $0x190] sm:$0xff]
    %v135 = vld [vmem:[#allocation7 + $0x198] sm:$0xff]
    %v136 = vld [vmem:[#allocation7 + $0x1a0] sm:$0xff]
    %v137 = vld [vmem:[#allocation7 + $0x1a8] sm:$0xff]
    %v138 = vld [vmem:[#allocation7 + $0x1b0] sm:$0xff]
    %v139 = vld [vmem:[#allocation7 + $0x1b8] sm:$0xff]
    %v140 = vld [vmem:[#allocation7 + $0x1c0] sm:$0xff]
    %v141 = vld [vmem:[#allocation7 + $0x1c8] sm:$0xff]
    %v142 = vld [vmem:[#allocation7 + $0x1d0] sm:$0xff]
    %v143 = vld [vmem:[#allocation7 + $0x1d8] sm:$0xff]
    %v144 = vld [vmem:[#allocation7 + $0x1e0] sm:$0xff]
    %v145 = vld [vmem:[#allocation7 + $0x1e8] sm:$0xff]
    %v146 = vld [vmem:[#allocation7 + $0x1f0] sm:$0xff]
    %v147 = vld [vmem:[#allocation7 + $0x1f8] sm:$0xff]
    %v148 = vld [vmem:[#allocation5] sm:$0xff]
    %v150 = vperm.slane %v148, 0
    %v151 = vperm.slane %v148, 1
    %v152 = vperm.slane %v148, 2
    %v153 = vperm.slane %v148, 3
    %v154 = vperm.slane %v148, 4
    %v155 = vperm.slane %v148, 5
    %v156 = vperm.slane %v148, 6
    %v157 = vperm.slane %v148, 7
    %v168 = vunpack.c.l.b16 %v82
    %v169 = vunpack.c.l.b16 %v83
    %v170 = vpack.c.b16 %v169, %v168
    %v236 = vunpack.c.l.b16 %v84
    %v237 = vunpack.c.h.b16 %v84
    %v238 = vunpack.c.l.b16 %v85
    %v239 = vunpack.c.h.b16 %v85
    %v240 = vunpack.c.l.b16 %v86
    %v241 = vunpack.c.h.b16 %v86
    %v242 = vunpack.c.l.b16 %v87
    %v243 = vunpack.c.h.b16 %v87
    %v244 = vunpack.c.l.b16 %v88
    %v245 = vunpack.c.h.b16 %v88
    %v246 = vunpack.c.l.b16 %v89
    %v247 = vunpack.c.h.b16 %v89
    %v248 = vunpack.c.l.b16 %v90
    %v249 = vunpack.c.h.b16 %v90
    %v250 = vunpack.c.l.b16 %v91
    %v251 = vunpack.c.h.b16 %v91
    %v252 = vunpack.c.l.b16 %v92
    %v253 = vunpack.c.h.b16 %v92
    %v254 = vunpack.c.l.b16 %v93
    %v255 = vunpack.c.h.b16 %v93
    %v256 = vunpack.c.l.b16 %v94
    %v257 = vunpack.c.h.b16 %v94
    %v258 = vunpack.c.l.b16 %v95
    %v259 = vunpack.c.h.b16 %v95
    %v260 = vunpack.c.l.b16 %v96
    %v261 = vunpack.c.h.b16 %v96
    %v262 = vunpack.c.l.b16 %v97
    %v263 = vunpack.c.h.b16 %v97
    %v264 = vunpack.c.l.b16 %v98
    %v265 = vunpack.c.h.b16 %v98
    %v266 = vunpack.c.l.b16 %v99
    %v267 = vunpack.c.h.b16 %v99
    %v268 = vunpack.c.l.b16 %v100
    %v269 = vunpack.c.h.b16 %v100
    %v270 = vunpack.c.l.b16 %v101
    %v271 = vunpack.c.h.b16 %v101
    %v272 = vunpack.c.l.b16 %v102
    %v273 = vunpack.c.h.b16 %v102
    %v274 = vunpack.c.l.b16 %v103
    %v275 = vunpack.c.h.b16 %v103
    %v276 = vunpack.c.l.b16 %v104
    %v277 = vunpack.c.h.b16 %v104
    %v278 = vunpack.c.l.b16 %v105
    %v279 = vunpack.c.h.b16 %v105
    %v280 = vunpack.c.l.b16 %v106
    %v281 = vunpack.c.h.b16 %v106
    %v282 = vunpack.c.l.b16 %v107
    %v283 = vunpack.c.h.b16 %v107
    %v284 = vunpack.c.l.b16 %v108
    %v285 = vunpack.c.h.b16 %v108
    %v286 = vunpack.c.l.b16 %v109
    %v287 = vunpack.c.h.b16 %v109
    %v288 = vunpack.c.l.b16 %v110
    %v289 = vunpack.c.h.b16 %v110
    %v290 = vunpack.c.l.b16 %v111
    %v291 = vunpack.c.h.b16 %v111
    %v292 = vunpack.c.l.b16 %v112
    %v293 = vunpack.c.h.b16 %v112
    %v294 = vunpack.c.l.b16 %v113
    %v295 = vunpack.c.h.b16 %v113
    %v296 = vunpack.c.l.b16 %v114
    %v297 = vunpack.c.h.b16 %v114
    %v298 = vunpack.c.l.b16 %v115
    %v299 = vunpack.c.h.b16 %v115
    %v300 = vunpack.c.l.b16 %v116
    %v301 = vunpack.c.h.b16 %v116
    %v302 = vunpack.c.l.b16 %v117
    %v303 = vunpack.c.h.b16 %v117
    %v304 = vunpack.c.l.b16 %v118
    %v305 = vunpack.c.h.b16 %v118
    %v306 = vunpack.c.l.b16 %v119
    %v307 = vunpack.c.h.b16 %v119
    %v308 = vunpack.c.l.b16 %v120
    %v309 = vunpack.c.h.b16 %v120
    %v310 = vunpack.c.l.b16 %v121
    %v311 = vunpack.c.h.b16 %v121
    %v312 = vunpack.c.l.b16 %v122
    %v313 = vunpack.c.h.b16 %v122
    %v314 = vunpack.c.l.b16 %v123
    %v315 = vunpack.c.h.b16 %v123
    %v316 = vunpack.c.l.b16 %v124
    %v317 = vunpack.c.h.b16 %v124
    %v318 = vunpack.c.l.b16 %v125
    %v319 = vunpack.c.h.b16 %v125
    %v320 = vunpack.c.l.b16 %v126
    %v321 = vunpack.c.h.b16 %v126
    %v322 = vunpack.c.l.b16 %v127
    %v323 = vunpack.c.h.b16 %v127
    %v324 = vunpack.c.l.b16 %v128
    %v325 = vunpack.c.h.b16 %v128
    %v326 = vunpack.c.l.b16 %v129
    %v327 = vunpack.c.h.b16 %v129
    %v328 = vunpack.c.l.b16 %v130
    %v329 = vunpack.c.h.b16 %v130
    %v330 = vunpack.c.l.b16 %v131
    %v331 = vunpack.c.h.b16 %v131
    %v332 = vunpack.c.l.b16 %v132
    %v333 = vunpack.c.h.b16 %v132
    %v334 = vunpack.c.l.b16 %v133
    %v335 = vunpack.c.h.b16 %v133
    %v336 = vunpack.c.l.b16 %v134
    %v337 = vunpack.c.h.b16 %v134
    %v338 = vunpack.c.l.b16 %v135
    %v339 = vunpack.c.h.b16 %v135
    %v340 = vunpack.c.l.b16 %v136
    %v341 = vunpack.c.h.b16 %v136
    %v342 = vunpack.c.l.b16 %v137
    %v343 = vunpack.c.h.b16 %v137
    %v344 = vunpack.c.l.b16 %v138
    %v345 = vunpack.c.h.b16 %v138
    %v346 = vunpack.c.l.b16 %v139
    %v347 = vunpack.c.h.b16 %v139
    %v348 = vunpack.c.l.b16 %v140
    %v349 = vunpack.c.h.b16 %v140
    %v350 = vunpack.c.l.b16 %v141
    %v351 = vunpack.c.h.b16 %v141
    %v352 = vunpack.c.l.b16 %v142
    %v353 = vunpack.c.h.b16 %v142
    %v354 = vunpack.c.l.b16 %v143
    %v355 = vunpack.c.h.b16 %v143
    %v356 = vunpack.c.l.b16 %v144
    %v357 = vunpack.c.h.b16 %v144
    %v358 = vunpack.c.l.b16 %v145
    %v359 = vunpack.c.h.b16 %v145
    %v360 = vunpack.c.l.b16 %v146
    %v361 = vunpack.c.h.b16 %v146
    %v362 = vunpack.c.l.b16 %v147
    %v363 = vunpack.c.h.b16 %v147
    %v364 = vpack.c.b16 %v244, %v236
    %v365 = vpack.c.b16 %v245, %v237
    %v366 = vpack.c.b16 %v246, %v238
    %v367 = vpack.c.b16 %v247, %v239
    %v368 = vpack.c.b16 %v248, %v240
    %v369 = vpack.c.b16 %v249, %v241
    %v370 = vpack.c.b16 %v250, %v242
    %v371 = vpack.c.b16 %v251, %v243
    %v372 = vpack.c.b16 %v260, %v252
    %v373 = vpack.c.b16 %v261, %v253
    %v374 = vpack.c.b16 %v262, %v254
    %v375 = vpack.c.b16 %v263, %v255
    %v376 = vpack.c.b16 %v264, %v256
    %v377 = vpack.c.b16 %v265, %v257
    %v378 = vpack.c.b16 %v266, %v258
    %v379 = vpack.c.b16 %v267, %v259
    %v380 = vpack.c.b16 %v276, %v268
    %v381 = vpack.c.b16 %v277, %v269
    %v382 = vpack.c.b16 %v278, %v270
    %v383 = vpack.c.b16 %v279, %v271
    %v384 = vpack.c.b16 %v280, %v272
    %v385 = vpack.c.b16 %v281, %v273
    %v386 = vpack.c.b16 %v282, %v274
    %v387 = vpack.c.b16 %v283, %v275
    %v388 = vpack.c.b16 %v292, %v284
    %v389 = vpack.c.b16 %v293, %v285
    %v390 = vpack.c.b16 %v294, %v286
    %v391 = vpack.c.b16 %v295, %v287
    %v392 = vpack.c.b16 %v296, %v288
    %v393 = vpack.c.b16 %v297, %v289
    %v394 = vpack.c.b16 %v298, %v290
    %v395 = vpack.c.b16 %v299, %v291
    %v396 = vpack.c.b16 %v308, %v300
    %v397 = vpack.c.b16 %v309, %v301
    %v398 = vpack.c.b16 %v310, %v302
    %v399 = vpack.c.b16 %v311, %v303
    %v400 = vpack.c.b16 %v312, %v304
    %v401 = vpack.c.b16 %v313, %v305
    %v402 = vpack.c.b16 %v314, %v306
    %v403 = vpack.c.b16 %v315, %v307
    %v404 = vpack.c.b16 %v324, %v316
    %v405 = vpack.c.b16 %v325, %v317
    %v406 = vpack.c.b16 %v326, %v318
    %v407 = vpack.c.b16 %v327, %v319
    %v408 = vpack.c.b16 %v328, %v320
    %v409 = vpack.c.b16 %v329, %v321
    %v410 = vpack.c.b16 %v330, %v322
    %v411 = vpack.c.b16 %v331, %v323
    %v412 = vpack.c.b16 %v340, %v332
    %v413 = vpack.c.b16 %v341, %v333
    %v414 = vpack.c.b16 %v342, %v334
    %v415 = vpack.c.b16 %v343, %v335
    %v416 = vpack.c.b16 %v344, %v336
    %v417 = vpack.c.b16 %v345, %v337
    %v418 = vpack.c.b16 %v346, %v338
    %v419 = vpack.c.b16 %v347, %v339
    %v420 = vpack.c.b16 %v356, %v348
    %v421 = vpack.c.b16 %v357, %v349
    %v422 = vpack.c.b16 %v358, %v350
    %v423 = vpack.c.b16 %v359, %v351
    %v424 = vpack.c.b16 %v360, %v352
    %v425 = vpack.c.b16 %v361, %v353
    %v426 = vpack.c.b16 %v362, %v354
    %v427 = vpack.c.b16 %v363, %v355
    %492 = vmatpush.bf16.msra.mxu0 %v420
    %493 = vmatpush.bf16.msra.mxu0 %v412
    %494 = vmatpush.bf16.msra.mxu0 %v404
    %495 = vmatpush.bf16.msra.mxu0 %v396
    %496 = vmatpush.bf16.msra.mxu0 %v388
    %497 = vmatpush.bf16.msra.mxu0 %v380
    %498 = vmatpush.bf16.msra.mxu0 %v372
    %499 = vmatpush.bf16.msra.mxu0 %v364
    %500 = vmatmul.bf16.gmra.mxu0 %v170
    %v501 = vpop.f32.mrf.mxu0
    %v502 = vadd.f32 %v150, %v501
    %v503 = vpop.f32.mrf.mxu0
    %v504 = vadd.f32 %v150, %v503
    %505 = vdwg.mxu0
    %506 = vmatpush.bf16.msra.mxu0 %v421
    %507 = vmatpush.bf16.msra.mxu0 %v413
    %508 = vmatpush.bf16.msra.mxu0 %v405
    %509 = vmatpush.bf16.msra.mxu0 %v397
    %510 = vmatpush.bf16.msra.mxu0 %v389
    %511 = vmatpush.bf16.msra.mxu0 %v381
    %512 = vmatpush.bf16.msra.mxu0 %v373
    %513 = vmatpush.bf16.msra.mxu0 %v365
    %514 = vmatmul.bf16.gmra.mxu0 %v170
    %v515 = vpop.f32.mrf.mxu0
    %v516 = vadd.f32 %v151, %v515
    %v517 = vpop.f32.mrf.mxu0
    %v518 = vadd.f32 %v151, %v517
    %519 = vdwg.mxu0
    %520 = vmatpush.bf16.msra.mxu0 %v422
    %521 = vmatpush.bf16.msra.mxu0 %v414
    %522 = vmatpush.bf16.msra.mxu0 %v406
    %523 = vmatpush.bf16.msra.mxu0 %v398
    %524 = vmatpush.bf16.msra.mxu0 %v390
    %525 = vmatpush.bf16.msra.mxu0 %v382
    %526 = vmatpush.bf16.msra.mxu0 %v374
    %527 = vmatpush.bf16.msra.mxu0 %v366
    %528 = vmatmul.bf16.gmra.mxu0 %v170
    %v529 = vpop.f32.mrf.mxu0
    %v530 = vadd.f32 %v152, %v529
    %v531 = vpop.f32.mrf.mxu0
    %v532 = vadd.f32 %v152, %v531
    %533 = vdwg.mxu0
    %534 = vmatpush.bf16.msra.mxu0 %v423
    %535 = vmatpush.bf16.msra.mxu0 %v415
    %536 = vmatpush.bf16.msra.mxu0 %v407
    %537 = vmatpush.bf16.msra.mxu0 %v399
    %538 = vmatpush.bf16.msra.mxu0 %v391
    %539 = vmatpush.bf16.msra.mxu0 %v383
    %540 = vmatpush.bf16.msra.mxu0 %v375
    %541 = vmatpush.bf16.msra.mxu0 %v367
    %542 = vmatmul.bf16.gmra.mxu0 %v170
    %v543 = vpop.f32.mrf.mxu0
    %v544 = vadd.f32 %v153, %v543
    %v545 = vpop.f32.mrf.mxu0
    %v546 = vadd.f32 %v153, %v545
    %547 = vdwg.mxu0
    %548 = vmatpush.bf16.msra.mxu0 %v424
    %549 = vmatpush.bf16.msra.mxu0 %v416
    %550 = vmatpush.bf16.msra.mxu0 %v408
    %551 = vmatpush.bf16.msra.mxu0 %v400
    %552 = vmatpush.bf16.msra.mxu0 %v392
    %553 = vmatpush.bf16.msra.mxu0 %v384
    %554 = vmatpush.bf16.msra.mxu0 %v376
    %555 = vmatpush.bf16.msra.mxu0 %v368
    %556 = vmatmul.bf16.gmra.mxu0 %v170
    %v557 = vpop.f32.mrf.mxu0
    %v558 = vadd.f32 %v154, %v557
    %v559 = vpop.f32.mrf.mxu0
    %v560 = vadd.f32 %v154, %v559
    %561 = vdwg.mxu0
    %562 = vmatpush.bf16.msra.mxu0 %v425
    %563 = vmatpush.bf16.msra.mxu0 %v417
    %564 = vmatpush.bf16.msra.mxu0 %v409
    %565 = vmatpush.bf16.msra.mxu0 %v401
    %566 = vmatpush.bf16.msra.mxu0 %v393
    %567 = vmatpush.bf16.msra.mxu0 %v385
    %568 = vmatpush.bf16.msra.mxu0 %v377
    %569 = vmatpush.bf16.msra.mxu0 %v369
    %570 = vmatmul.bf16.gmra.mxu0 %v170
    %v571 = vpop.f32.mrf.mxu0
    %v572 = vadd.f32 %v155, %v571
    %v573 = vpop.f32.mrf.mxu0
    %v574 = vadd.f32 %v155, %v573
    %575 = vdwg.mxu0
    %576 = vmatpush.bf16.msra.mxu0 %v426
    %577 = vmatpush.bf16.msra.mxu0 %v418
    %578 = vmatpush.bf16.msra.mxu0 %v410
    %579 = vmatpush.bf16.msra.mxu0 %v402
    %580 = vmatpush.bf16.msra.mxu0 %v394
    %581 = vmatpush.bf16.msra.mxu0 %v386
    %582 = vmatpush.bf16.msra.mxu0 %v378
    %583 = vmatpush.bf16.msra.mxu0 %v370
    %584 = vmatmul.bf16.gmra.mxu0 %v170
    %v585 = vpop.f32.mrf.mxu0
    %v586 = vadd.f32 %v156, %v585
    %v587 = vpop.f32.mrf.mxu0
    %v588 = vadd.f32 %v156, %v587
    %589 = vdwg.mxu0
    %590 = vmatpush.bf16.msra.mxu0 %v427
    %591 = vmatpush.bf16.msra.mxu0 %v419
    %592 = vmatpush.bf16.msra.mxu0 %v411
    %593 = vmatpush.bf16.msra.mxu0 %v403
    %594 = vmatpush.bf16.msra.mxu0 %v395
    %595 = vmatpush.bf16.msra.mxu0 %v387
    %596 = vmatpush.bf16.msra.mxu0 %v379
    %597 = vmatpush.bf16.msra.mxu0 %v371
    %598 = vmatmul.bf16.gmra.mxu0 %v170
    %v599 = vpop.f32.mrf.mxu0
    %v600 = vadd.f32 %v157, %v599
    %v601 = vpop.f32.mrf.mxu0
    %v602 = vadd.f32 %v157, %v601
    %603 = vdwg.mxu0
    %v604 = vmax.f32 %v502, 0.0
    %v605 = vmax.f32 %v516, 0.0
    %v606 = vmax.f32 %v530, 0.0
    %v607 = vmax.f32 %v544, 0.0
    %v608 = vmax.f32 %v558, 0.0
    %v609 = vmax.f32 %v572, 0.0
    %v610 = vmax.f32 %v586, 0.0
    %v611 = vmax.f32 %v600, 0.0
    %v612 = vmax.f32 %v504, 0.0
    %v613 = vmax.f32 %v518, 0.0
    %v614 = vmax.f32 %v532, 0.0
    %v615 = vmax.f32 %v546, 0.0
    %v616 = vmax.f32 %v560, 0.0
    %v617 = vmax.f32 %v574, 0.0
    %v618 = vmax.f32 %v588, 0.0
    %v619 = vmax.f32 %v602, 0.0
    %v620 = vadd.f32 %v604, %v605
    %v621 = vadd.f32 %v620, %v606
    %v622 = vadd.f32 %v621, %v607
    %v623 = vadd.f32 %v622, %v608
    %v624 = vadd.f32 %v623, %v609
    %v625 = vadd.f32 %v624, %v610
    %v626 = vadd.f32 %v625, %v611
    %627 = vadd.xlane.f32.xlu0 %v626
    %v628 = vpop.xlane.xlu0 %627
    %v629 = vadd.f32 %v612, %v613
    %v630 = vadd.f32 %v629, %v614
    %v631 = vadd.f32 %v630, %v615
    %v632 = vadd.f32 %v631, %v616
    %v633 = vadd.f32 %v632, %v617
    %v634 = vadd.f32 %v633, %v618
    %v635 = vadd.f32 %v634, %v619
    %636 = vadd.xlane.f32.xlu0 %v635
    %v637 = vpop.xlane.xlu0 %636
    %v638 = vmul.f32 %v604, %v604
    %v639 = vmul.f32 %v605, %v605
    %v640 = vmul.f32 %v606, %v606
    %v641 = vmul.f32 %v607, %v607
    %v642 = vmul.f32 %v608, %v608
    %v643 = vmul.f32 %v609, %v609
    %v644 = vmul.f32 %v610, %v610
    %v645 = vmul.f32 %v611, %v611
    %v646 = vmul.f32 %v612, %v612
    %v647 = vmul.f32 %v613, %v613
    %v648 = vmul.f32 %v614, %v614
    %v649 = vmul.f32 %v615, %v615
    %v650 = vmul.f32 %v616, %v616
    %v651 = vmul.f32 %v617, %v617
    %v652 = vmul.f32 %v618, %v618
    %v653 = vmul.f32 %v619, %v619
    %v654 = vadd.f32 %v638, %v639
    %v655 = vadd.f32 %v654, %v640
    %v656 = vadd.f32 %v655, %v641
    %v657 = vadd.f32 %v656, %v642
    %v658 = vadd.f32 %v657, %v643
    %v659 = vadd.f32 %v658, %v644
    %v660 = vadd.f32 %v659, %v645
    %661 = vadd.xlane.f32.xlu0 %v660
    %v662 = vpop.xlane.xlu0 %661
    %v663 = vadd.f32 %v646, %v647
    %v664 = vadd.f32 %v663, %v648
    %v665 = vadd.f32 %v664, %v649
    %v666 = vadd.f32 %v665, %v650
    %v667 = vadd.f32 %v666, %v651
    %v668 = vadd.f32 %v667, %v652
    %v669 = vadd.f32 %v668, %v653
    %670 = vadd.xlane.f32.xlu0 %v669
    %v671 = vpop.xlane.xlu0 %670
    %v672 = vmul.f32 %v628, 0.0009765625
    %v673 = vmul.f32 %v637, 0.0009765625
    %v674 = vmul.f32 %v662, 0.0009765625
    %v675 = vmul.f32 %v671, 0.0009765625
    %v676 = vmul.f32 %v672, %v672
    %v677 = vmul.f32 %v673, %v673
    %v678 = vsub.f32 %v674, %v676
    %v679 = vsub.f32 %v675, %v677
    %v680 = vmax.f32 %v678, 0.0
    %v681 = vmax.f32 %v679, 0.0
    %v682 = vsub.f32 %v604, %v672
    %v683 = vsub.f32 %v605, %v672
    %v684 = vsub.f32 %v606, %v672
    %v685 = vsub.f32 %v607, %v672
    %v686 = vsub.f32 %v608, %v672
    %v687 = vsub.f32 %v609, %v672
    %v688 = vsub.f32 %v610, %v672
    %v689 = vsub.f32 %v611, %v672
    %v690 = vsub.f32 %v612, %v673
    %v691 = vsub.f32 %v613, %v673
    %v692 = vsub.f32 %v614, %v673
    %v693 = vsub.f32 %v615, %v673
    %v694 = vsub.f32 %v616, %v673
    %v695 = vsub.f32 %v617, %v673
    %v696 = vsub.f32 %v618, %v673
    %v697 = vsub.f32 %v619, %v673
    %v698 = vadd.f32 %v680, 1e-05
    %v699 = vadd.f32 %v681, 1e-05
    %v700 = vrsqrt.pop %v698
    %v701 = vmul.f32 %v700, %v698
    %v702 = vmul.f32 %v701, %v700
    %v703 = vmul.f32 0.5, %v702
    %v704 = vsub.f32 1.5, %v703
    %v705 = vmul.f32 %v700, %v704
    %vm706 = vweird.f32 %v698
    %vm707 = vweird.f32 %v700
    %vm708 = vmor %vm706, %vm707
    %v709 = vsel %vm708, %v700, %v705
    %v710 = vrsqrt.pop %v699
    %v711 = vmul.f32 %v710, %v699
    %v712 = vmul.f32 %v711, %v710
    %v713 = vmul.f32 0.5, %v712
    %v714 = vsub.f32 1.5, %v713
    %v715 = vmul.f32 %v710, %v714
    %vm716 = vweird.f32 %v699
    %vm717 = vweird.f32 %v710
    %vm718 = vmor %vm716, %vm717
    %v719 = vsel %vm718, %v710, %v715
    %v720 = vmul.f32 %v682, %v709
    %v721 = vmul.f32 %v683, %v709
    %v722 = vmul.f32 %v684, %v709
    %v723 = vmul.f32 %v685, %v709
    %v724 = vmul.f32 %v686, %v709
    %v725 = vmul.f32 %v687, %v709
    %v726 = vmul.f32 %v688, %v709
    %v727 = vmul.f32 %v689, %v709
    %v728 = vmul.f32 %v690, %v719
    %v729 = vmul.f32 %v691, %v719
    %v730 = vmul.f32 %v692, %v719
    %v731 = vmul.f32 %v693, %v719
    %v732 = vmul.f32 %v694, %v719
    %v733 = vmul.f32 %v695, %v719
    %v734 = vmul.f32 %v696, %v719
    %v735 = vmul.f32 %v697, %v719
    %v736 = vpack.c.bf16 %v728, %v720
    %v737 = vpack.c.bf16 %v729, %v721
    %v738 = vpack.c.bf16 %v730, %v722
    %v739 = vpack.c.bf16 %v731, %v723
    %v740 = vpack.c.bf16 %v732, %v724
    %v741 = vpack.c.bf16 %v733, %v725
    %v742 = vpack.c.bf16 %v734, %v726
    %v743 = vpack.c.bf16 %v735, %v727
    %v744 = vld [vmem:[#allocation8] sm:$0xf]
    %v745 = vld [vmem:[#allocation8 + $0x4] sm:$0xf]
    %v746 = vld [vmem:[#allocation8 + $0x8] sm:$0xf]
    %v747 = vld [vmem:[#allocation8 + $0xc] sm:$0xf]
    %v748 = vld [vmem:[#allocation8 + $0x10] sm:$0xf]
    %v749 = vld [vmem:[#allocation8 + $0x14] sm:$0xf]
    %v750 = vld [vmem:[#allocation8 + $0x18] sm:$0xf]
    %v751 = vld [vmem:[#allocation8 + $0x1c] sm:$0xf]
    %v752 = vld [vmem:[#allocation8 + $0x20] sm:$0xf]
    %v753 = vld [vmem:[#allocation8 + $0x24] sm:$0xf]
    %v754 = vld [vmem:[#allocation8 + $0x28] sm:$0xf]
    %v755 = vld [vmem:[#allocation8 + $0x2c] sm:$0xf]
    %v756 = vld [vmem:[#allocation8 + $0x30] sm:$0xf]
    %v757 = vld [vmem:[#allocation8 + $0x34] sm:$0xf]
    %v758 = vld [vmem:[#allocation8 + $0x38] sm:$0xf]
    %v759 = vld [vmem:[#allocation8 + $0x3c] sm:$0xf]
    %v760 = vld [vmem:[#allocation8 + $0x40] sm:$0xf]
    %v761 = vld [vmem:[#allocation8 + $0x44] sm:$0xf]
    %v762 = vld [vmem:[#allocation8 + $0x48] sm:$0xf]
    %v763 = vld [vmem:[#allocation8 + $0x4c] sm:$0xf]
    %v764 = vld [vmem:[#allocation8 + $0x50] sm:$0xf]
    %v765 = vld [vmem:[#allocation8 + $0x54] sm:$0xf]
    %v766 = vld [vmem:[#allocation8 + $0x58] sm:$0xf]
    %v767 = vld [vmem:[#allocation8 + $0x5c] sm:$0xf]
    %v768 = vld [vmem:[#allocation8 + $0x60] sm:$0xf]
    %v769 = vld [vmem:[#allocation8 + $0x64] sm:$0xf]
    %v770 = vld [vmem:[#allocation8 + $0x68] sm:$0xf]
    %v771 = vld [vmem:[#allocation8 + $0x6c] sm:$0xf]
    %v772 = vld [vmem:[#allocation8 + $0x70] sm:$0xf]
    %v773 = vld [vmem:[#allocation8 + $0x74] sm:$0xf]
    %v774 = vld [vmem:[#allocation8 + $0x78] sm:$0xf]
    %v775 = vld [vmem:[#allocation8 + $0x7c] sm:$0xf]
    %v776 = vld [vmem:[#allocation8 + $0x80] sm:$0xf]
    %v777 = vld [vmem:[#allocation8 + $0x84] sm:$0xf]
    %v778 = vld [vmem:[#allocation8 + $0x88] sm:$0xf]
    %v779 = vld [vmem:[#allocation8 + $0x8c] sm:$0xf]
    %v780 = vld [vmem:[#allocation8 + $0x90] sm:$0xf]
    %v781 = vld [vmem:[#allocation8 + $0x94] sm:$0xf]
    %v782 = vld [vmem:[#allocation8 + $0x98] sm:$0xf]
    %v783 = vld [vmem:[#allocation8 + $0x9c] sm:$0xf]
    %v784 = vld [vmem:[#allocation8 + $0xa0] sm:$0xf]
    %v785 = vld [vmem:[#allocation8 + $0xa4] sm:$0xf]
    %v786 = vld [vmem:[#allocation8 + $0xa8] sm:$0xf]
    %v787 = vld [vmem:[#allocation8 + $0xac] sm:$0xf]
    %v788 = vld [vmem:[#allocation8 + $0xb0] sm:$0xf]
    %v789 = vld [vmem:[#allocation8 + $0xb4] sm:$0xf]
    %v790 = vld [vmem:[#allocation8 + $0xb8] sm:$0xf]
    %v791 = vld [vmem:[#allocation8 + $0xbc] sm:$0xf]
    %v792 = vld [vmem:[#allocation8 + $0xc0] sm:$0xf]
    %v793 = vld [vmem:[#allocation8 + $0xc4] sm:$0xf]
    %v794 = vld [vmem:[#allocation8 + $0xc8] sm:$0xf]
    %v795 = vld [vmem:[#allocation8 + $0xcc] sm:$0xf]
    %v796 = vld [vmem:[#allocation8 + $0xd0] sm:$0xf]
    %v797 = vld [vmem:[#allocation8 + $0xd4] sm:$0xf]
    %v798 = vld [vmem:[#allocation8 + $0xd8] sm:$0xf]
    %v799 = vld [vmem:[#allocation8 + $0xdc] sm:$0xf]
    %v800 = vld [vmem:[#allocation8 + $0xe0] sm:$0xf]
    %v801 = vld [vmem:[#allocation8 + $0xe4] sm:$0xf]
    %v802 = vld [vmem:[#allocation8 + $0xe8] sm:$0xf]
    %v803 = vld [vmem:[#allocation8 + $0xec] sm:$0xf]
    %v804 = vld [vmem:[#allocation8 + $0xf0] sm:$0xf]
    %v805 = vld [vmem:[#allocation8 + $0xf4] sm:$0xf]
    %v806 = vld [vmem:[#allocation8 + $0xf8] sm:$0xf]
    %v807 = vld [vmem:[#allocation8 + $0xfc] sm:$0xf]
    %v808 = vld [vmem:[#allocation8 + $0x100] sm:$0xf]
    %v809 = vld [vmem:[#allocation8 + $0x104] sm:$0xf]
    %v810 = vld [vmem:[#allocation8 + $0x108] sm:$0xf]
    %v811 = vld [vmem:[#allocation8 + $0x10c] sm:$0xf]
    %v812 = vld [vmem:[#allocation8 + $0x110] sm:$0xf]
    %v813 = vld [vmem:[#allocation8 + $0x114] sm:$0xf]
    %v814 = vld [vmem:[#allocation8 + $0x118] sm:$0xf]
    %v815 = vld [vmem:[#allocation8 + $0x11c] sm:$0xf]
    %v816 = vld [vmem:[#allocation8 + $0x120] sm:$0xf]
    %v817 = vld [vmem:[#allocation8 + $0x124] sm:$0xf]
    %v818 = vld [vmem:[#allocation8 + $0x128] sm:$0xf]
    %v819 = vld [vmem:[#allocation8 + $0x12c] sm:$0xf]
    %v820 = vld [vmem:[#allocation8 + $0x130] sm:$0xf]
    %v821 = vld [vmem:[#allocation8 + $0x134] sm:$0xf]
    %v822 = vld [vmem:[#allocation8 + $0x138] sm:$0xf]
    %v823 = vld [vmem:[#allocation8 + $0x13c] sm:$0xf]
    %v824 = vld [vmem:[#allocation8 + $0x140] sm:$0xf]
    %v825 = vld [vmem:[#allocation8 + $0x144] sm:$0xf]
    %v826 = vld [vmem:[#allocation8 + $0x148] sm:$0xf]
    %v827 = vld [vmem:[#allocation8 + $0x14c] sm:$0xf]
    %v828 = vld [vmem:[#allocation8 + $0x150] sm:$0xf]
    %v829 = vld [vmem:[#allocation8 + $0x154] sm:$0xf]
    %v830 = vld [vmem:[#allocation8 + $0x158] sm:$0xf]
    %v831 = vld [vmem:[#allocation8 + $0x15c] sm:$0xf]
    %v832 = vld [vmem:[#allocation8 + $0x160] sm:$0xf]
    %v833 = vld [vmem:[#allocation8 + $0x164] sm:$0xf]
    %v834 = vld [vmem:[#allocation8 + $0x168] sm:$0xf]
    %v835 = vld [vmem:[#allocation8 + $0x16c] sm:$0xf]
    %v836 = vld [vmem:[#allocation8 + $0x170] sm:$0xf]
    %v837 = vld [vmem:[#allocation8 + $0x174] sm:$0xf]
    %v838 = vld [vmem:[#allocation8 + $0x178] sm:$0xf]
    %v839 = vld [vmem:[#allocation8 + $0x17c] sm:$0xf]
    %v840 = vld [vmem:[#allocation8 + $0x180] sm:$0xf]
    %v841 = vld [vmem:[#allocation8 + $0x184] sm:$0xf]
    %v842 = vld [vmem:[#allocation8 + $0x188] sm:$0xf]
    %v843 = vld [vmem:[#allocation8 + $0x18c] sm:$0xf]
    %v844 = vld [vmem:[#allocation8 + $0x190] sm:$0xf]
    %v845 = vld [vmem:[#allocation8 + $0x194] sm:$0xf]
    %v846 = vld [vmem:[#allocation8 + $0x198] sm:$0xf]
    %v847 = vld [vmem:[#allocation8 + $0x19c] sm:$0xf]
    %v848 = vld [vmem:[#allocation8 + $0x1a0] sm:$0xf]
    %v849 = vld [vmem:[#allocation8 + $0x1a4] sm:$0xf]
    %v850 = vld [vmem:[#allocation8 + $0x1a8] sm:$0xf]
    %v851 = vld [vmem:[#allocation8 + $0x1ac] sm:$0xf]
    %v852 = vld [vmem:[#allocation8 + $0x1b0] sm:$0xf]
    %v853 = vld [vmem:[#allocation8 + $0x1b4] sm:$0xf]
    %v854 = vld [vmem:[#allocation8 + $0x1b8] sm:$0xf]
    %v855 = vld [vmem:[#allocation8 + $0x1bc] sm:$0xf]
    %v856 = vld [vmem:[#allocation8 + $0x1c0] sm:$0xf]
    %v857 = vld [vmem:[#allocation8 + $0x1c4] sm:$0xf]
    %v858 = vld [vmem:[#allocation8 + $0x1c8] sm:$0xf]
    %v859 = vld [vmem:[#allocation8 + $0x1cc] sm:$0xf]
    %v860 = vld [vmem:[#allocation8 + $0x1d0] sm:$0xf]
    %v861 = vld [vmem:[#allocation8 + $0x1d4] sm:$0xf]
    %v862 = vld [vmem:[#allocation8 + $0x1d8] sm:$0xf]
    %v863 = vld [vmem:[#allocation8 + $0x1dc] sm:$0xf]
    %v864 = vld [vmem:[#allocation8 + $0x1e0] sm:$0xf]
    %v865 = vld [vmem:[#allocation8 + $0x1e4] sm:$0xf]
    %v866 = vld [vmem:[#allocation8 + $0x1e8] sm:$0xf]
    %v867 = vld [vmem:[#allocation8 + $0x1ec] sm:$0xf]
    %v868 = vld [vmem:[#allocation8 + $0x1f0] sm:$0xf]
    %v869 = vld [vmem:[#allocation8 + $0x1f4] sm:$0xf]
    %v870 = vld [vmem:[#allocation8 + $0x1f8] sm:$0xf]
    %v871 = vld [vmem:[#allocation8 + $0x1fc] sm:$0xf]
    %v872 = vld [vmem:[%s4] sm:$0x1]
    %v874 = vperm.slane %v872, 0
    %v1004 = vunpack.c.l.b16 %v744
    %v1005 = vunpack.c.l.b16 %v745
    %v1006 = vunpack.c.l.b16 %v746
    %v1007 = vunpack.c.l.b16 %v747
    %v1008 = vunpack.c.l.b16 %v748
    %v1009 = vunpack.c.l.b16 %v749
    %v1010 = vunpack.c.l.b16 %v750
    %v1011 = vunpack.c.l.b16 %v751
    %v1012 = vunpack.c.l.b16 %v752
    %v1013 = vunpack.c.l.b16 %v753
    %v1014 = vunpack.c.l.b16 %v754
    %v1015 = vunpack.c.l.b16 %v755
    %v1016 = vunpack.c.l.b16 %v756
    %v1017 = vunpack.c.l.b16 %v757
    %v1018 = vunpack.c.l.b16 %v758
    %v1019 = vunpack.c.l.b16 %v759
    %v1020 = vunpack.c.l.b16 %v760
    %v1021 = vunpack.c.l.b16 %v761
    %v1022 = vunpack.c.l.b16 %v762
    %v1023 = vunpack.c.l.b16 %v763
    %v1024 = vunpack.c.l.b16 %v764
    %v1025 = vunpack.c.l.b16 %v765
    %v1026 = vunpack.c.l.b16 %v766
    %v1027 = vunpack.c.l.b16 %v767
    %v1028 = vunpack.c.l.b16 %v768
    %v1029 = vunpack.c.l.b16 %v769
    %v1030 = vunpack.c.l.b16 %v770
    %v1031 = vunpack.c.l.b16 %v771
    %v1032 = vunpack.c.l.b16 %v772
    %v1033 = vunpack.c.l.b16 %v773
    %v1034 = vunpack.c.l.b16 %v774
    %v1035 = vunpack.c.l.b16 %v775
    %v1036 = vunpack.c.l.b16 %v776
    %v1037 = vunpack.c.l.b16 %v777
    %v1038 = vunpack.c.l.b16 %v778
    %v1039 = vunpack.c.l.b16 %v779
    %v1040 = vunpack.c.l.b16 %v780
    %v1041 = vunpack.c.l.b16 %v781
    %v1042 = vunpack.c.l.b16 %v782
    %v1043 = vunpack.c.l.b16 %v783
    %v1044 = vunpack.c.l.b16 %v784
    %v1045 = vunpack.c.l.b16 %v785
    %v1046 = vunpack.c.l.b16 %v786
    %v1047 = vunpack.c.l.b16 %v787
    %v1048 = vunpack.c.l.b16 %v788
    %v1049 = vunpack.c.l.b16 %v789
    %v1050 = vunpack.c.l.b16 %v790
    %v1051 = vunpack.c.l.b16 %v791
    %v1052 = vunpack.c.l.b16 %v792
    %v1053 = vunpack.c.l.b16 %v793
    %v1054 = vunpack.c.l.b16 %v794
    %v1055 = vunpack.c.l.b16 %v795
    %v1056 = vunpack.c.l.b16 %v796
    %v1057 = vunpack.c.l.b16 %v797
    %v1058 = vunpack.c.l.b16 %v798
    %v1059 = vunpack.c.l.b16 %v799
    %v1060 = vunpack.c.l.b16 %v800
    %v1061 = vunpack.c.l.b16 %v801
    %v1062 = vunpack.c.l.b16 %v802
    %v1063 = vunpack.c.l.b16 %v803
    %v1064 = vunpack.c.l.b16 %v804
    %v1065 = vunpack.c.l.b16 %v805
    %v1066 = vunpack.c.l.b16 %v806
    %v1067 = vunpack.c.l.b16 %v807
    %v1068 = vunpack.c.l.b16 %v808
    %v1069 = vunpack.c.l.b16 %v809
    %v1070 = vunpack.c.l.b16 %v810
    %v1071 = vunpack.c.l.b16 %v811
    %v1072 = vunpack.c.l.b16 %v812
    %v1073 = vunpack.c.l.b16 %v813
    %v1074 = vunpack.c.l.b16 %v814
    %v1075 = vunpack.c.l.b16 %v815
    %v1076 = vunpack.c.l.b16 %v816
    %v1077 = vunpack.c.l.b16 %v817
    %v1078 = vunpack.c.l.b16 %v818
    %v1079 = vunpack.c.l.b16 %v819
    %v1080 = vunpack.c.l.b16 %v820
    %v1081 = vunpack.c.l.b16 %v821
    %v1082 = vunpack.c.l.b16 %v822
    %v1083 = vunpack.c.l.b16 %v823
    %v1084 = vunpack.c.l.b16 %v824
    %v1085 = vunpack.c.l.b16 %v825
    %v1086 = vunpack.c.l.b16 %v826
    %v1087 = vunpack.c.l.b16 %v827
    %v1088 = vunpack.c.l.b16 %v828
    %v1089 = vunpack.c.l.b16 %v829
    %v1090 = vunpack.c.l.b16 %v830
    %v1091 = vunpack.c.l.b16 %v831
    %v1092 = vunpack.c.l.b16 %v832
    %v1093 = vunpack.c.l.b16 %v833
    %v1094 = vunpack.c.l.b16 %v834
    %v1095 = vunpack.c.l.b16 %v835
    %v1096 = vunpack.c.l.b16 %v836
    %v1097 = vunpack.c.l.b16 %v837
    %v1098 = vunpack.c.l.b16 %v838
    %v1099 = vunpack.c.l.b16 %v839
    %v1100 = vunpack.c.l.b16 %v840
    %v1101 = vunpack.c.l.b16 %v841
    %v1102 = vunpack.c.l.b16 %v842
    %v1103 = vunpack.c.l.b16 %v843
    %v1104 = vunpack.c.l.b16 %v844
    %v1105 = vunpack.c.l.b16 %v845
    %v1106 = vunpack.c.l.b16 %v846
    %v1107 = vunpack.c.l.b16 %v847
    %v1108 = vunpack.c.l.b16 %v848
    %v1109 = vunpack.c.l.b16 %v849
    %v1110 = vunpack.c.l.b16 %v850
    %v1111 = vunpack.c.l.b16 %v851
    %v1112 = vunpack.c.l.b16 %v852
    %v1113 = vunpack.c.l.b16 %v853
    %v1114 = vunpack.c.l.b16 %v854
    %v1115 = vunpack.c.l.b16 %v855
    %v1116 = vunpack.c.l.b16 %v856
    %v1117 = vunpack.c.l.b16 %v857
    %v1118 = vunpack.c.l.b16 %v858
    %v1119 = vunpack.c.l.b16 %v859
    %v1120 = vunpack.c.l.b16 %v860
    %v1121 = vunpack.c.l.b16 %v861
    %v1122 = vunpack.c.l.b16 %v862
    %v1123 = vunpack.c.l.b16 %v863
    %v1124 = vunpack.c.l.b16 %v864
    %v1125 = vunpack.c.l.b16 %v865
    %v1126 = vunpack.c.l.b16 %v866
    %v1127 = vunpack.c.l.b16 %v867
    %v1128 = vunpack.c.l.b16 %v868
    %v1129 = vunpack.c.l.b16 %v869
    %v1130 = vunpack.c.l.b16 %v870
    %v1131 = vunpack.c.l.b16 %v871
    %v1132 = vpack.c.b16 %v1005, %v1004
    %v1133 = vpack.c.b16 %v1007, %v1006
    %v1134 = vpack.c.b16 %v1009, %v1008
    %v1135 = vpack.c.b16 %v1011, %v1010
    %v1136 = vpack.c.b16 %v1013, %v1012
    %v1137 = vpack.c.b16 %v1015, %v1014
    %v1138 = vpack.c.b16 %v1017, %v1016
    %v1139 = vpack.c.b16 %v1019, %v1018
    %v1140 = vpack.c.b16 %v1021, %v1020
    %v1141 = vpack.c.b16 %v1023, %v1022
    %v1142 = vpack.c.b16 %v1025, %v1024
    %v1143 = vpack.c.b16 %v1027, %v1026
    %v1144 = vpack.c.b16 %v1029, %v1028
    %v1145 = vpack.c.b16 %v1031, %v1030
    %v1146 = vpack.c.b16 %v1033, %v1032
    %v1147 = vpack.c.b16 %v1035, %v1034
    %v1148 = vpack.c.b16 %v1037, %v1036
    %v1149 = vpack.c.b16 %v1039, %v1038
    %v1150 = vpack.c.b16 %v1041, %v1040
    %v1151 = vpack.c.b16 %v1043, %v1042
    %v1152 = vpack.c.b16 %v1045, %v1044
    %v1153 = vpack.c.b16 %v1047, %v1046
    %v1154 = vpack.c.b16 %v1049, %v1048
    %v1155 = vpack.c.b16 %v1051, %v1050
    %v1156 = vpack.c.b16 %v1053, %v1052
    %v1157 = vpack.c.b16 %v1055, %v1054
    %v1158 = vpack.c.b16 %v1057, %v1056
    %v1159 = vpack.c.b16 %v1059, %v1058
    %v1160 = vpack.c.b16 %v1061, %v1060
    %v1161 = vpack.c.b16 %v1063, %v1062
    %v1162 = vpack.c.b16 %v1065, %v1064
    %v1163 = vpack.c.b16 %v1067, %v1066
    %v1164 = vpack.c.b16 %v1069, %v1068
    %v1165 = vpack.c.b16 %v1071, %v1070
    %v1166 = vpack.c.b16 %v1073, %v1072
    %v1167 = vpack.c.b16 %v1075, %v1074
    %v1168 = vpack.c.b16 %v1077, %v1076
    %v1169 = vpack.c.b16 %v1079, %v1078
    %v1170 = vpack.c.b16 %v1081, %v1080
    %v1171 = vpack.c.b16 %v1083, %v1082
    %v1172 = vpack.c.b16 %v1085, %v1084
    %v1173 = vpack.c.b16 %v1087, %v1086
    %v1174 = vpack.c.b16 %v1089, %v1088
    %v1175 = vpack.c.b16 %v1091, %v1090
    %v1176 = vpack.c.b16 %v1093, %v1092
    %v1177 = vpack.c.b16 %v1095, %v1094
    %v1178 = vpack.c.b16 %v1097, %v1096
    %v1179 = vpack.c.b16 %v1099, %v1098
    %v1180 = vpack.c.b16 %v1101, %v1100
    %v1181 = vpack.c.b16 %v1103, %v1102
    %v1182 = vpack.c.b16 %v1105, %v1104
    %v1183 = vpack.c.b16 %v1107, %v1106
    %v1184 = vpack.c.b16 %v1109, %v1108
    %v1185 = vpack.c.b16 %v1111, %v1110
    %v1186 = vpack.c.b16 %v1113, %v1112
    %v1187 = vpack.c.b16 %v1115, %v1114
    %v1188 = vpack.c.b16 %v1117, %v1116
    %v1189 = vpack.c.b16 %v1119, %v1118
    %v1190 = vpack.c.b16 %v1121, %v1120
    %v1191 = vpack.c.b16 %v1123, %v1122
    %v1192 = vpack.c.b16 %v1125, %v1124
    %v1193 = vpack.c.b16 %v1127, %v1126
    %v1194 = vpack.c.b16 %v1129, %v1128
    %v1195 = vpack.c.b16 %v1131, %v1130
    %1260 = vmatpush.bf16.msra.mxu0 %v1139
    %1261 = vmatpush.bf16.msra.mxu0 %v1138
    %1262 = vmatpush.bf16.msra.mxu0 %v1137
    %1263 = vmatpush.bf16.msra.mxu0 %v1136
    %1264 = vmatpush.bf16.msra.mxu0 %v1135
    %1265 = vmatpush.bf16.msra.mxu0 %v1134
    %1266 = vmatpush.bf16.msra.mxu0 %v1133
    %1267 = vmatpush.bf16.msra.mxu0 %v1132
    %1268 = vmatmul.bf16.gmra.mxu0 %v736
    %v1269 = vpop.f32.mrf.mxu0
    %v1270 = vadd.f32 %v874, %v1269
    %v1271 = vpop.f32.mrf.mxu0
    %v1272 = vadd.f32 %v874, %v1271
    %1273 = vdwg.mxu0
    %1274 = vmatpush.bf16.msra.mxu0 %v1147
    %1275 = vmatpush.bf16.msra.mxu0 %v1146
    %1276 = vmatpush.bf16.msra.mxu0 %v1145
    %1277 = vmatpush.bf16.msra.mxu0 %v1144
    %1278 = vmatpush.bf16.msra.mxu0 %v1143
    %1279 = vmatpush.bf16.msra.mxu0 %v1142
    %1280 = vmatpush.bf16.msra.mxu0 %v1141
    %1281 = vmatpush.bf16.msra.mxu0 %v1140
    %1282 = vmatmul.bf16.gmra.mxu0 %v737
    %v1283 = vpop.f32.mrf.mxu0
    %v1284 = vadd.f32 %v1270, %v1283
    %v1285 = vpop.f32.mrf.mxu0
    %v1286 = vadd.f32 %v1272, %v1285
    %1287 = vdwg.mxu0
    %1288 = vmatpush.bf16.msra.mxu0 %v1155
    %1289 = vmatpush.bf16.msra.mxu0 %v1154
    %1290 = vmatpush.bf16.msra.mxu0 %v1153
    %1291 = vmatpush.bf16.msra.mxu0 %v1152
    %1292 = vmatpush.bf16.msra.mxu0 %v1151
    %1293 = vmatpush.bf16.msra.mxu0 %v1150
    %1294 = vmatpush.bf16.msra.mxu0 %v1149
    %1295 = vmatpush.bf16.msra.mxu0 %v1148
    %1296 = vmatmul.bf16.gmra.mxu0 %v738
    %v1297 = vpop.f32.mrf.mxu0
    %v1298 = vadd.f32 %v1284, %v1297
    %v1299 = vpop.f32.mrf.mxu0
    %v1300 = vadd.f32 %v1286, %v1299
    %1301 = vdwg.mxu0
    %1302 = vmatpush.bf16.msra.mxu0 %v1163
    %1303 = vmatpush.bf16.msra.mxu0 %v1162
    %1304 = vmatpush.bf16.msra.mxu0 %v1161
    %1305 = vmatpush.bf16.msra.mxu0 %v1160
    %1306 = vmatpush.bf16.msra.mxu0 %v1159
    %1307 = vmatpush.bf16.msra.mxu0 %v1158
    %1308 = vmatpush.bf16.msra.mxu0 %v1157
    %1309 = vmatpush.bf16.msra.mxu0 %v1156
    %1310 = vmatmul.bf16.gmra.mxu0 %v739
    %v1311 = vpop.f32.mrf.mxu0
    %v1312 = vadd.f32 %v1298, %v1311
    %v1313 = vpop.f32.mrf.mxu0
    %v1314 = vadd.f32 %v1300, %v1313
    %1315 = vdwg.mxu0
    %1316 = vmatpush.bf16.msra.mxu0 %v1171
    %1317 = vmatpush.bf16.msra.mxu0 %v1170
    %1318 = vmatpush.bf16.msra.mxu0 %v1169
    %1319 = vmatpush.bf16.msra.mxu0 %v1168
    %1320 = vmatpush.bf16.msra.mxu0 %v1167
    %1321 = vmatpush.bf16.msra.mxu0 %v1166
    %1322 = vmatpush.bf16.msra.mxu0 %v1165
    %1323 = vmatpush.bf16.msra.mxu0 %v1164
    %1324 = vmatmul.bf16.gmra.mxu0 %v740
    %v1325 = vpop.f32.mrf.mxu0
    %v1326 = vadd.f32 %v1312, %v1325
    %v1327 = vpop.f32.mrf.mxu0
    %v1328 = vadd.f32 %v1314, %v1327
    %1329 = vdwg.mxu0
    %1330 = vmatpush.bf16.msra.mxu0 %v1179
    %1331 = vmatpush.bf16.msra.mxu0 %v1178
    %1332 = vmatpush.bf16.msra.mxu0 %v1177
    %1333 = vmatpush.bf16.msra.mxu0 %v1176
    %1334 = vmatpush.bf16.msra.mxu0 %v1175
    %1335 = vmatpush.bf16.msra.mxu0 %v1174
    %1336 = vmatpush.bf16.msra.mxu0 %v1173
    %1337 = vmatpush.bf16.msra.mxu0 %v1172
    %1338 = vmatmul.bf16.gmra.mxu0 %v741
    %v1339 = vpop.f32.mrf.mxu0
    %v1340 = vadd.f32 %v1326, %v1339
    %v1341 = vpop.f32.mrf.mxu0
    %v1342 = vadd.f32 %v1328, %v1341
    %1343 = vdwg.mxu0
    %1344 = vmatpush.bf16.msra.mxu0 %v1187
    %1345 = vmatpush.bf16.msra.mxu0 %v1186
    %1346 = vmatpush.bf16.msra.mxu0 %v1185
    %1347 = vmatpush.bf16.msra.mxu0 %v1184
    %1348 = vmatpush.bf16.msra.mxu0 %v1183
    %1349 = vmatpush.bf16.msra.mxu0 %v1182
    %1350 = vmatpush.bf16.msra.mxu0 %v1181
    %1351 = vmatpush.bf16.msra.mxu0 %v1180
    %1352 = vmatmul.bf16.gmra.mxu0 %v742
    %v1353 = vpop.f32.mrf.mxu0
    %v1354 = vadd.f32 %v1340, %v1353
    %v1355 = vpop.f32.mrf.mxu0
    %v1356 = vadd.f32 %v1342, %v1355
    %1357 = vdwg.mxu0
    %1358 = vmatpush.bf16.msra.mxu0 %v1195
    %1359 = vmatpush.bf16.msra.mxu0 %v1194
    %1360 = vmatpush.bf16.msra.mxu0 %v1193
    %1361 = vmatpush.bf16.msra.mxu0 %v1192
    %1362 = vmatpush.bf16.msra.mxu0 %v1191
    %1363 = vmatpush.bf16.msra.mxu0 %v1190
    %1364 = vmatpush.bf16.msra.mxu0 %v1189
    %1365 = vmatpush.bf16.msra.mxu0 %v1188
    %1366 = vmatmul.bf16.gmra.mxu0 %v743
    %v1367 = vpop.f32.mrf.mxu0
    %v1368 = vadd.f32 %v1354, %v1367
    %v1369 = vpop.f32.mrf.mxu0
    %v1370 = vadd.f32 %v1356, %v1369
    %1371 = vdwg.mxu0
    %v1372 = vpack.c.bf16 %v1368, %v1368
    %v1373 = vpack.c.bf16 %v1370, %v1370
    %1374 = vst [vmem:[#allocation10] sm:$0xf] %v1372
    %1375 = vst [vmem:[#allocation10 + $0x4] sm:$0xf] %v1373
    // Predicated region
    $region38: #{tpu_custom_call.1} parent=1 // pred_check
      _
    $region39: #{tpu_custom_call.1} parent=1 // pred_check_branch
      %1377 = sbr.rel (0) target = $region41
    $region40: #{tpu_custom_call.1} parent=1 // pred_region
      %1379 = vsyncadd [#allocation4], 0
      %s1380 = sshll.u32 [#allocation10], 4
      %s1381 = int_to_ptr.vmem [resolvable:$true] %s1380
      %s1382 = sshll.u32 %s5, 4
      %s1383 = int_to_ptr.hbm [resolvable:$true] %s1382
      %1388 = dma.vmem_to_hbm [thread:$0]  %s1381, 128, %s1383, [#allocation4], 64, 64, 4
    $region41: #{tpu_custom_call.1} parent=1 // pred_fallthru
      _
    // Predicated region
    $region42: #{tpu_custom_call.1} parent=1 // pred_check
      _
    $region43: #{tpu_custom_call.1} parent=1 // pred_check_branch
      %1390 = sbr.rel (0) target = $region45
    $region44: #{tpu_custom_call.1} parent=1 // pred_region
      %1392 = dma.done [#allocation4], 128
    $region45: #{tpu_custom_call.1} parent=1 // pred_fallthru
      _
    %1393 = vsyncpa [#allocation3], 1
    %1394 = vsyncpa [#allocation6], 1
    %1395 = vsyncpa [#allocation9], 1
    %1396 = vsyncpa [#allocation4], 1

</llo_original>
